<compile_context>
chip_gen: v7x
topology: tpu7x:2x2x1
jax: 0.10.0
libtpu: 0.0.40
codegen_flags: <defaults>
</compile_context>

<pallas_src>
import numpy as np
import jax
import jax.numpy as jnp
from jax.experimental import pallas as pl
from jax.experimental.pallas import tpu as pltpu

# ---- synthetic "env" / module hyper-parameters ----
NUM_VERTICAL = 12
NUM_HORIZONTAL = 6
NUM_KIND = 4                   # must be even for the 2-kinds-per-vreg lane packing
CONNECTED_THRESHOLD = 4        # eg.connected_threshold_default
NUM_DEPTH = 2                  # num_depth in generate_linear_input
BATCH = 96                     # GA population, evaluated in ONE pallas_call

HALF_K = max(NUM_VERTICAL - 2, NUM_HORIZONTAL) // 2
FULL_K = 2 * HALF_K + 1
VH = NUM_VERTICAL - 2          # the top 2 (hidden) rows are dropped: dots[0:-2]
W = NUM_HORIZONTAL
N = VH * W                     # linear_input_size (= 60)
N_SQUARE = 100

LANES = 128                    # feature lanes
KIND_BLOCK = 64                # lane offset of the second kind block
H_PAD = 128                    # padded hidden width
NK2 = NUM_KIND // 2            # sublane kind-tiles after packing 2 kinds per vreg row
assert NUM_KIND % 2 == 0 and N <= KIND_BLOCK


# ------------------------------------ kernel math -----------------------------------------------
def _kernel_math(x, rhs_en, m_not2, m_empty, w1, w2, b2, w3r, b3r):
    """x: (TB, 128) f32 board kinds in {0..NUM_KIND}; the N=60 real cells are replicated in
    lanes [0:60] and [64:124] so two kinds share one vreg row.  Faithful to
    CNN_symmetry.generate_linear_input + the 3-layer MLP head."""
    f32 = jnp.float32
    tb = x.shape[0]

    def bdot(lhs, rhs):          # bf16 MXU matmul, f32 accumulation
        return jnp.dot(lhs.astype(jnp.bfloat16), rhs, preferred_element_type=f32)

    def tsum(a):                 # (NK2, tb, L) -> (tb, L): sum the kind tiles (VPU adds)
        s = a[0]
        for t in range(1, NK2):
            s = s + a[t]
        return s

    def fold(a):                 # combine the two 64-lane kind blocks; both halves get the sum
        return a + pltpu.roll(a, shift=KIND_BLOCK, axis=1)

    lane = jax.lax.broadcasted_iota(jnp.int32, (tb, LANES), 1)
    valid = ((lane & (KIND_BLOCK - 1)) < N).astype(f32)      # real cells of both lane blocks
    kbase = 1.0 + (lane >= KIND_BLOCK).astype(f32)           # kind id of this lane block (tile 0)

    empty = jnp.where(x == 0.0, valid, 0.0)                  # exact 0/1, zero on pad lanes
    empty_value = bdot(empty, m_empty)                       # conv2d_empty (same in both blocks)
    ev3 = empty_value[None]                                  # broadcast view, no replication copy

    # per-tile kind masks: tile t holds kind 2t+1 (low lanes) and kind 2t+2 (high lanes)
    ecm3 = jnp.stack([(x == kbase + 2.0 * t).astype(f32) for t in range(NK2)])
    necm3 = jnp.stack([((x != kbase + 2.0 * t) & (x != 0.0)).astype(f32) * valid
                       for t in range(NK2)])

    # conv2d_each_color(ecm) - conv2d_not_each_color(necm): ONE fused K=256 matmul
    lhs_en = jnp.concatenate([ecm3, necm3], axis=-1).reshape(NK2 * tb, 2 * LANES)
    ecv3 = bdot(lhs_en, rhs_en).reshape(NK2, tb, LANES)
    ecv3 = (ecv3 + ev3) * ecm3                               # += empty_value; ecv[~ecm] = 0
    acv2 = 0.5 * jnp.tanh(0.5 * fold(tsum(ecv3))) + 0.5      # sigmoid via the EUP tanh

    for _ in range(NUM_DEPTH):                               # static unroll (num_depth = 2)
        lhs2 = (necm3 * acv2[None]).reshape(NK2 * tb, LANES)
        n2 = bdot(lhs2, m_not2).reshape(NK2, tb, LANES)      # conv2d_not_each_color_2nd
        ecv3 = (ecv3 + ev3 + n2) * ecm3                      # torch mutates the value log
        acv2 = jnp.tanh(0.5 * fold(tsum(ecv3)))              # sigmoid(x)*2-1 == tanh(x/2)

    # layer1 (no bias) -> leaky_relu(0.2) -> layer2 (+bias) -> leaky_relu(0.2) -> layer3 (+bias)
    h = bdot(acv2, w1)
    h = jnp.where(h >= 0.0, h, 0.2 * h)
    h = bdot(h, w2) + b2
    h = jnp.where(h >= 0.0, h, 0.2 * h)
    # layer3 has a single real output lane: VPU multiply + XLU lane reduction, no MXU matmul
    o = jnp.sum(h * w3r, axis=-1, keepdims=True)             # (tb, 1)
    return o + b3r                                           # (tb, 128); every lane = result


# ------------------------------------- Pallas kernel --------------------------------------------
def cnn_symmetry_kernel(x_ref, rhs_en_ref, m_not2_ref, m_empty_ref,
                        w1_ref, w2_ref, b2_ref, w3_ref, b3_ref, out_ref):
    out_ref[...] = _kernel_math(
        x_ref[...], rhs_en_ref[...], m_not2_ref[...], m_empty_ref[...],
        w1_ref[...], w2_ref[...], b2_ref[...], w3_ref[...], b3_ref[...])


def _batch_tile(b):
    """One grid step per TensorCore: 1 tile on v5e/v6e, 2 equal real-row tiles on v7x."""
    steps = 1
    try:
        if "v7" in jax.devices()[0].device_kind.lower():
            steps = 2
    except Exception:
        pass
    tb = -(-b // steps)
    return max(8, -(-tb // 8) * 8)       # sublane multiple of 8


def cnn_symmetry_forward(dots_kind_matrix_3d, params):
    # torch: dots[0:-2].transpose(2,0,1)[:, None] -> (B, 1, VH, W); here flattened row-major,
    # then replicated into the two 64-lane kind blocks.
    x = jnp.asarray(dots_kind_matrix_3d)[:-2]                                   # (VH, W, B)
    x = jnp.transpose(x, (2, 0, 1)).reshape(-1, N).astype(jnp.float32)          # (B, N)
    b = x.shape[0]
    tb = _batch_tile(b)
    b_pad = tb * pl.cdiv(b, tb)
    x_pad = jnp.zeros((b_pad, LANES), jnp.float32)
    x_pad = x_pad.at[:b, :N].set(x).at[:b, KIND_BLOCK:KIND_BLOCK + N].set(x)

    const = lambda i: (0, 0)      # weights: same block every grid step -> stay VMEM-resident
    grid_spec = pltpu.PrefetchScalarGridSpec(
        num_scalar_prefetch=0,
        grid=(b_pad // tb,),
        in_specs=[pl.BlockSpec((tb, LANES), lambda i: (i, 0)),     # x: one batch tile per step
                  pl.BlockSpec((2 * LANES, LANES), const),         # fused [m_each; -m_not] (bf16)
                  pl.BlockSpec((LANES, LANES), const),             # m_not2  (bf16, block-diag)
                  pl.BlockSpec((LANES, LANES), const),             # m_empty (bf16, block-diag)
                  pl.BlockSpec((LANES, H_PAD), const),             # w1 (bf16)
                  pl.BlockSpec((H_PAD, H_PAD), const),             # w2 (bf16)
                  pl.BlockSpec((1, H_PAD), const),                 # b2 (f32)
                  pl.BlockSpec((1, H_PAD), const),                 # w3 row (f32)
                  pl.BlockSpec((1, LANES), const)],                # b3 row (f32)
        out_specs=pl.BlockSpec((tb, LANES), lambda i: (i, 0)),
    )
    out = pl.pallas_call(
        cnn_symmetry_kernel,
        out_shape=jax.ShapeDtypeStruct((b_pad, LANES), jnp.float32),
        grid_spec=grid_spec,
        compiler_params=pltpu.CompilerParams(dimension_semantics=("parallel",)),
    )(x_pad, params["rhs_en"], params["m_not2"], params["m_empty"],
      params["w1"], params["w2"], params["b2"], params["w3_row"], params["b3_row"])
    return out[:b, :1]                                                          # (B, 1)


# ------------------------- spec-faithful f32 reference (per-kind loop, unpadded) ----------------
def _reference_forward(x, raw):
    hi = jax.lax.Precision.HIGHEST
    dot = lambda a, m: jnp.dot(a, m, precision=hi, preferred_element_type=jnp.float32)
    empty = (x == 0).astype(jnp.float32)
    empty_value = dot(empty, raw["m_empty"])
    acv = jnp.zeros_like(x)
    ecm_log, ecv_log, necm_log = [], [], []
    for ii in range(NUM_KIND):
        ecm = (x == ii + 1).astype(jnp.float32)
        necm = ((ecm + empty) == 0).astype(jnp.float32)
        ecv = (dot(ecm, raw["m_each"]) + empty_value - dot(necm, raw["m_not"])) * ecm
        acv = acv + ecv
        ecm_log.append(ecm); ecv_log.append(ecv); necm_log.append(necm)
    acv2 = 1.0 / (1.0 + jnp.exp(-acv))
    for _ in range(NUM_DEPTH):
        before = acv2
        acv2 = jnp.zeros_like(x)
        for ii in range(NUM_KIND):
            n2 = dot(necm_log[ii] * before, raw["m_not2"])
            ecv_log[ii] = (ecv_log[ii] + empty_value + n2) * ecm_log[ii]
            acv2 = acv2 + ecv_log[ii]
        acv2 = 1.0 / (1.0 + jnp.exp(-acv2)) * 2.0 - 1.0
    h = dot(acv2, raw["w1"])
    h = jnp.where(h >= 0, h, 0.2 * h)
    h = dot(h, raw["w2"]) + raw["b2"]
    h = jnp.where(h >= 0, h, 0.2 * h)
    return dot(h, raw["w3"]) + raw["b3"]


# ---------------------------------- parameter construction --------------------------------------
def build_conv_kernel(w_lin):
    """Replicates the symmetric conv2d weight construction done in __init__/forward."""
    K = np.zeros((FULL_K, FULL_K), np.float32)
    K[:, HALF_K:HALF_K + CONNECTED_THRESHOLD] = w_lin
    K[:, HALF_K - CONNECTED_THRESHOLD + 1:HALF_K + 1] = w_lin[:, ::-1]
    K[HALF_K, HALF_K] = 0.0
    return K


def conv_as_matmul(K, vh, w):
    """(N,N) matrix M s.t. (x_flat @ M) == conv2d(x, K, padding=HALF_K) flattened row-major."""
    hk = K.shape[0] // 2
    n = vh * w
    M = np.zeros((n, n), np.float32)
    for r in range(vh):
        for s in range(w):
            for p in range(vh):
                for q in range(w):
                    i, j = r - p + hk, s - q + hk
                    if 0 <= i < K.shape[0] and 0 <= j < K.shape[1]:
                        M[r * w + s, p * w + q] = K[i, j]
    return M


def pad2(a, shape):
    out = np.zeros(shape, np.float32)
    out[:a.shape[0], :a.shape[1]] = a
    return out


def pack_block_diag(M):
    """Place the (N,N) conv matrix at lanes [0:N] and [64:64+N] (block diagonal, 128x128)."""
    out = np.zeros((LANES, LANES), np.float32)
    out[:N, :N] = M
    out[KIND_BLOCK:KIND_BLOCK + N, KIND_BLOCK:KIND_BLOCK + N] = M
    return out


def init_params(key):
    keys = jax.random.split(key, 9)
    # 4 "dummy linear" weights (full_kernel_size, connected_threshold): abs(init) * 0.1
    conv_raw = []
    for i in range(4):
        wl = np.abs(np.asarray(
            jax.random.normal(keys[i], (FULL_K, CONNECTED_THRESHOLD), jnp.float32))) * 0.1
        conv_raw.append(conv_as_matmul(build_conv_kernel(wl), VH, W))
    m_each, m_not, m_not2, m_empty = conv_raw

    # layer1/2/3: normal(0, 0.2) weights, normal(0, 0.1) biases (torch stores weight as (out,in))
    w1 = np.asarray(jax.random.normal(keys[4], (N_SQUARE, N), jnp.float32)) * 0.2
    w2 = np.asarray(jax.random.normal(keys[5], (N_SQUARE, N_SQUARE), jnp.float32)) * 0.2
    b2 = np.asarray(jax.random.normal(keys[6], (N_SQUARE,), jnp.float32)) * 0.1
    w3 = np.asarray(jax.random.normal(keys[7], (1, N_SQUARE), jnp.float32)) * 0.2
    b3 = np.asarray(jax.random.normal(keys[8], (1,), jnp.float32)) * 0.1

    bf16 = jnp.bfloat16
    # fused K-stacked RHS: conv_each(ecm) - conv_not(necm) in a single 256-deep contraction
    rhs_en = np.vstack([pack_block_diag(m_each), -pack_block_diag(m_not)])       # (256, 128)

    params = dict(
        # pad/pack with exact zeros FIRST, then cast, so padding is exactly 0 in bf16 too
        rhs_en=jnp.asarray(rhs_en).astype(bf16),
        m_not2=jnp.asarray(pack_block_diag(m_not2)).astype(bf16),
        m_empty=jnp.asarray(pack_block_diag(m_empty)).astype(bf16),
        w1=jnp.asarray(pad2(w1.T, (LANES, H_PAD))).astype(bf16),
        w2=jnp.asarray(pad2(w2.T, (H_PAD, H_PAD))).astype(bf16),
        b2=jnp.asarray(pad2(b2[None, :], (1, H_PAD))),
        w3_row=jnp.asarray(pad2(w3, (1, H_PAD))),            # layer-3 weights along hidden lanes
        b3_row=jnp.asarray(np.full((1, LANES), float(b3[0]), np.float32)),
    )
    raw = dict(
        m_each=jnp.asarray(m_each), m_not=jnp.asarray(m_not),
        m_not2=jnp.asarray(m_not2), m_empty=jnp.asarray(m_empty),
        w1=jnp.asarray(w1.T), w2=jnp.asarray(w2.T), b2=jnp.asarray(b2),
        w3=jnp.asarray(w3.T), b3=jnp.asarray(b3),
    )
    return params, raw


if __name__ == "__main__":
    root = jax.random.PRNGKey(0)
    k_params, k_board = jax.random.split(root)
    params, raw = init_params(k_params)

    # GA population of boards with kinds in {0..NUM_KIND}, shape (num_vertical, num_horizontal, B)
    board = jax.random.randint(k_board, (NUM_VERTICAL, NUM_HORIZONTAL, BATCH), 0, NUM_KIND + 1)

    out = cnn_symmetry_forward(board, params)
    out = jax.block_until_ready(out)

    # spec-faithful f32 per-kind reference; tolerance is relative to the output scale since the
    # kernel weights were cast to bf16.
    x = jnp.transpose(jnp.asarray(board)[:-2], (2, 0, 1)).reshape(-1, N).astype(jnp.float32)
    ref = _reference_forward(x, raw)

    assert out.shape == (BATCH, 1)
    assert bool(jnp.all(jnp.isfinite(out)))
    scale = float(jnp.max(jnp.abs(ref)))
    err = float(jnp.max(jnp.abs(out - ref)))
    assert err < 5e-2 + 1e-1 * scale, f"max abs err {err} (ref scale {scale})"
    print("KERNEL_OK")
</pallas_src>

<mosaic_0001>
module attributes {stable_mosaic.version = 11 : i64} {
  func.func @cnn_symmetry_kernel(%arg0: i32, %arg1: memref<96x128xf32, #tpu.memory_space<vmem>>, %arg2: memref<256x128xbf16, #tpu.memory_space<vmem>>, %arg3: memref<128x128xbf16, #tpu.memory_space<vmem>>, %arg4: memref<128x128xbf16, #tpu.memory_space<vmem>>, %arg5: memref<128x128xbf16, #tpu.memory_space<vmem>>, %arg6: memref<128x128xbf16, #tpu.memory_space<vmem>>, %arg7: memref<1x128xf32, #tpu.memory_space<vmem>>, %arg8: memref<1x128xf32, #tpu.memory_space<vmem>>, %arg9: memref<1x128xf32, #tpu.memory_space<vmem>>, %arg10: memref<96x128xf32, #tpu.memory_space<vmem>>) attributes {dimension_semantics = [#tpu.dimension_semantics<parallel>], iteration_bounds = array<i64: 1>, scalar_prefetch = 0 : i64, scratch_operands = 0 : i64, tpu.core_type = #tpu.core_type<tc>, window_params = [{transform_indices = @transform_0, window_bounds = array<i64: 96, 128>}, {pipeline_mode = #tpu.pipeline_mode<synchronous>, transform_indices = @transform_1, window_bounds = array<i64: 256, 128>}, {pipeline_mode = #tpu.pipeline_mode<synchronous>, transform_indices = @transform_2, window_bounds = array<i64: 128, 128>}, {pipeline_mode = #tpu.pipeline_mode<synchronous>, transform_indices = @transform_3, window_bounds = array<i64: 128, 128>}, {pipeline_mode = #tpu.pipeline_mode<synchronous>, transform_indices = @transform_4, window_bounds = array<i64: 128, 128>}, {pipeline_mode = #tpu.pipeline_mode<synchronous>, transform_indices = @transform_5, window_bounds = array<i64: 128, 128>}, {pipeline_mode = #tpu.pipeline_mode<synchronous>, transform_indices = @transform_6, window_bounds = array<i64: 1, 128>}, {pipeline_mode = #tpu.pipeline_mode<synchronous>, transform_indices = @transform_7, window_bounds = array<i64: 1, 128>}, {pipeline_mode = #tpu.pipeline_mode<synchronous>, transform_indices = @transform_8, window_bounds = array<i64: 1, 128>}, {transform_indices = @transform_9, window_bounds = array<i64: 96, 128>}]} {
    %c0 = arith.constant 0 : index
    %c0_0 = arith.constant 0 : index
    %0 = vector.load %arg1[%c0, %c0_0] : memref<96x128xf32, #tpu.memory_space<vmem>>, vector<96x128xf32>
    %c0_1 = arith.constant 0 : index
    %c0_2 = arith.constant 0 : index
    %1 = vector.load %arg2[%c0_1, %c0_2] : memref<256x128xbf16, #tpu.memory_space<vmem>>, vector<256x128xbf16>
    %c0_3 = arith.constant 0 : index
    %c0_4 = arith.constant 0 : index
    %2 = vector.load %arg3[%c0_3, %c0_4] : memref<128x128xbf16, #tpu.memory_space<vmem>>, vector<128x128xbf16>
    %c0_5 = arith.constant 0 : index
    %c0_6 = arith.constant 0 : index
    %3 = vector.load %arg4[%c0_5, %c0_6] : memref<128x128xbf16, #tpu.memory_space<vmem>>, vector<128x128xbf16>
    %c0_7 = arith.constant 0 : index
    %c0_8 = arith.constant 0 : index
    %4 = vector.load %arg5[%c0_7, %c0_8] : memref<128x128xbf16, #tpu.memory_space<vmem>>, vector<128x128xbf16>
    %c0_9 = arith.constant 0 : index
    %c0_10 = arith.constant 0 : index
    %5 = vector.load %arg6[%c0_9, %c0_10] : memref<128x128xbf16, #tpu.memory_space<vmem>>, vector<128x128xbf16>
    %c0_11 = arith.constant 0 : index
    %c0_12 = arith.constant 0 : index
    %6 = vector.load %arg7[%c0_11, %c0_12] : memref<1x128xf32, #tpu.memory_space<vmem>>, vector<1x128xf32>
    %c0_13 = arith.constant 0 : index
    %c0_14 = arith.constant 0 : index
    %7 = vector.load %arg8[%c0_13, %c0_14] : memref<1x128xf32, #tpu.memory_space<vmem>>, vector<1x128xf32>
    %c0_15 = arith.constant 0 : index
    %c0_16 = arith.constant 0 : index
    %8 = vector.load %arg9[%c0_15, %c0_16] : memref<1x128xf32, #tpu.memory_space<vmem>>, vector<1x128xf32>
    %9 = tpu.iota {dimensions = array<i32: 1>} : vector<96x128xi32>
    %c63_i32 = arith.constant 63 : i32
    %10 = vector.broadcast %c63_i32 : i32 to vector<96x128xi32>
    %11 = arith.andi %9, %10 : vector<96x128xi32>
    %c60_i32 = arith.constant 60 : i32
    %12 = vector.broadcast %c60_i32 : i32 to vector<96x128xi32>
    %13 = arith.cmpi slt, %11, %12 : vector<96x128xi32>
    %14 = arith.extui %13 : vector<96x128xi1> to vector<96x128xi32>
    %15 = arith.sitofp %14 : vector<96x128xi32> to vector<96x128xf32>
    %c64_i32 = arith.constant 64 : i32
    %16 = vector.broadcast %c64_i32 : i32 to vector<96x128xi32>
    %17 = arith.cmpi sge, %9, %16 : vector<96x128xi32>
    %18 = arith.extui %17 : vector<96x128xi1> to vector<96x128xi32>
    %19 = arith.sitofp %18 : vector<96x128xi32> to vector<96x128xf32>
    %cst = arith.constant 1.000000e+00 : f32
    %20 = vector.broadcast %cst : f32 to vector<96x128xf32>
    %21 = arith.addf %20, %19 : vector<96x128xf32>
    %cst_17 = arith.constant 0.000000e+00 : f32
    %22 = vector.broadcast %cst_17 : f32 to vector<96x128xf32>
    %23 = arith.cmpf oeq, %0, %22 : vector<96x128xf32>
    %cst_18 = arith.constant 0.000000e+00 : f32
    %24 = vector.broadcast %cst_18 : f32 to vector<96x128xf32>
    %25 = arith.select %23, %15, %24 : vector<96x128xi1>, vector<96x128xf32>
    %26 = arith.truncf %25 : vector<96x128xf32> to vector<96x128xbf16>
    %cst_19 = arith.constant dense<0.000000e+00> : vector<96x128xf32>
    %27 = tpu.matmul %26, %3, %cst_19 {dimension_numbers = #tpu.dot_dimension_numbers<[1], [0], [0], [1], [0, 0, 1, 1], [], []>} : vector<96x128xbf16>, vector<128x128xbf16>, vector<96x128xf32> -> vector<96x128xf32>
    %28 = vector.shape_cast %27 : vector<96x128xf32> to vector<1x96x128xf32>
    %cst_20 = arith.constant 0.000000e+00 : f32
    %29 = vector.broadcast %cst_20 : f32 to vector<96x128xf32>
    %30 = arith.addf %21, %29 : vector<96x128xf32>
    %31 = arith.cmpf oeq, %0, %30 : vector<96x128xf32>
    %32 = arith.extui %31 : vector<96x128xi1> to vector<96x128xi32>
    %33 = arith.sitofp %32 : vector<96x128xi32> to vector<96x128xf32>
    %cst_21 = arith.constant 2.000000e+00 : f32
    %34 = vector.broadcast %cst_21 : f32 to vector<96x128xf32>
    %35 = arith.addf %21, %34 : vector<96x128xf32>
    %36 = arith.cmpf oeq, %0, %35 : vector<96x128xf32>
    %37 = arith.extui %36 : vector<96x128xi1> to vector<96x128xi32>
    %38 = arith.sitofp %37 : vector<96x128xi32> to vector<96x128xf32>
    %39 = vector.shape_cast %33 : vector<96x128xf32> to vector<1x96x128xf32>
    %40 = vector.shape_cast %38 : vector<96x128xf32> to vector<1x96x128xf32>
    %41 = tpu.concatenate %39, %40 in 0 : vector<1x96x128xf32>, vector<1x96x128xf32> -> vector<2x96x128xf32>
    %cst_22 = arith.constant 0.000000e+00 : f32
    %42 = vector.broadcast %cst_22 : f32 to vector<96x128xf32>
    %43 = arith.addf %21, %42 : vector<96x128xf32>
    %44 = arith.cmpf one, %0, %43 : vector<96x128xf32>
    %cst_23 = arith.constant 0.000000e+00 : f32
    %45 = vector.broadcast %cst_23 : f32 to vector<96x128xf32>
    %46 = arith.cmpf one, %0, %45 : vector<96x128xf32>
    %47 = arith.andi %44, %46 : vector<96x128xi1>
    %48 = arith.extui %47 : vector<96x128xi1> to vector<96x128xi32>
    %49 = arith.sitofp %48 : vector<96x128xi32> to vector<96x128xf32>
    %50 = arith.mulf %49, %15 : vector<96x128xf32>
    %cst_24 = arith.constant 2.000000e+00 : f32
    %51 = vector.broadcast %cst_24 : f32 to vector<96x128xf32>
    %52 = arith.addf %21, %51 : vector<96x128xf32>
    %53 = arith.cmpf one, %0, %52 : vector<96x128xf32>
    %cst_25 = arith.constant 0.000000e+00 : f32
    %54 = vector.broadcast %cst_25 : f32 to vector<96x128xf32>
    %55 = arith.cmpf one, %0, %54 : vector<96x128xf32>
    %56 = arith.andi %53, %55 : vector<96x128xi1>
    %57 = arith.extui %56 : vector<96x128xi1> to vector<96x128xi32>
    %58 = arith.sitofp %57 : vector<96x128xi32> to vector<96x128xf32>
    %59 = arith.mulf %58, %15 : vector<96x128xf32>
    %60 = vector.shape_cast %50 : vector<96x128xf32> to vector<1x96x128xf32>
    %61 = vector.shape_cast %59 : vector<96x128xf32> to vector<1x96x128xf32>
    %62 = tpu.concatenate %60, %61 in 0 : vector<1x96x128xf32>, vector<1x96x128xf32> -> vector<2x96x128xf32>
    %63 = tpu.concatenate %41, %62 in 2 : vector<2x96x128xf32>, vector<2x96x128xf32> -> vector<2x96x256xf32>
    %64 = vector.shape_cast %63 : vector<2x96x256xf32> to vector<192x256xf32>
    %65 = arith.truncf %64 : vector<192x256xf32> to vector<192x256xbf16>
    %cst_26 = arith.constant dense<0.000000e+00> : vector<192x128xf32>
    %66 = tpu.matmul %65, %1, %cst_26 {dimension_numbers = #tpu.dot_dimension_numbers<[1], [0], [0], [1], [0, 0, 1, 1], [], []>} : vector<192x256xbf16>, vector<256x128xbf16>, vector<192x128xf32> -> vector<192x128xf32>
    %67 = vector.shape_cast %66 : vector<192x128xf32> to vector<2x96x128xf32>
    %68 = vector.broadcast %28 : vector<1x96x128xf32> to vector<2x96x128xf32>
    %69 = arith.addf %67, %68 : vector<2x96x128xf32>
    %70 = arith.mulf %69, %41 : vector<2x96x128xf32>
    %71 = vector.extract_strided_slice %70 {offsets = [0, 0, 0], sizes = [1, 96, 128], strides = [1, 1, 1]} : vector<2x96x128xf32> to vector<1x96x128xf32>
    %72 = vector.shape_cast %71 : vector<1x96x128xf32> to vector<96x128xf32>
    %73 = vector.extract_strided_slice %70 {offsets = [1, 0, 0], sizes = [1, 96, 128], strides = [1, 1, 1]} : vector<2x96x128xf32> to vector<1x96x128xf32>
    %74 = vector.shape_cast %73 : vector<1x96x128xf32> to vector<96x128xf32>
    %75 = arith.addf %72, %74 : vector<96x128xf32>
    %c64_i32_27 = arith.constant 64 : i32
    %76 = tpu.dynamic_rotate %75 by %c64_i32_27 dim 1 : vector<96x128xf32>, i32 -> vector<96x128xf32>
    %77 = arith.addf %75, %76 : vector<96x128xf32>
    %cst_28 = arith.constant 5.000000e-01 : f32
    %78 = vector.broadcast %cst_28 : f32 to vector<96x128xf32>
    %79 = arith.mulf %78, %77 : vector<96x128xf32>
    %80 = math.tanh %79 : vector<96x128xf32>
    %cst_29 = arith.constant 5.000000e-01 : f32
    %81 = vector.broadcast %cst_29 : f32 to vector<96x128xf32>
    %82 = arith.mulf %81, %80 : vector<96x128xf32>
    %cst_30 = arith.constant 5.000000e-01 : f32
    %83 = vector.broadcast %cst_30 : f32 to vector<96x128xf32>
    %84 = arith.addf %82, %83 : vector<96x128xf32>
    %85 = vector.shape_cast %84 : vector<96x128xf32> to vector<1x96x128xf32>
    %86 = vector.broadcast %85 : vector<1x96x128xf32> to vector<2x96x128xf32>
    %87 = arith.mulf %62, %86 : vector<2x96x128xf32>
    %88 = vector.shape_cast %87 : vector<2x96x128xf32> to vector<192x128xf32>
    %89 = arith.truncf %88 : vector<192x128xf32> to vector<192x128xbf16>
    %cst_31 = arith.constant dense<0.000000e+00> : vector<192x128xf32>
    %90 = tpu.matmul %89, %2, %cst_31 {dimension_numbers = #tpu.dot_dimension_numbers<[1], [0], [0], [1], [0, 0, 1, 1], [], []>} : vector<192x128xbf16>, vector<128x128xbf16>, vector<192x128xf32> -> vector<192x128xf32>
    %91 = vector.shape_cast %90 : vector<192x128xf32> to vector<2x96x128xf32>
    %92 = vector.broadcast %28 : vector<1x96x128xf32> to vector<2x96x128xf32>
    %93 = arith.addf %70, %92 : vector<2x96x128xf32>
    %94 = arith.addf %93, %91 : vector<2x96x128xf32>
    %95 = arith.mulf %94, %41 : vector<2x96x128xf32>
    %96 = vector.extract_strided_slice %95 {offsets = [0, 0, 0], sizes = [1, 96, 128], strides = [1, 1, 1]} : vector<2x96x128xf32> to vector<1x96x128xf32>
    %97 = vector.shape_cast %96 : vector<1x96x128xf32> to vector<96x128xf32>
    %98 = vector.extract_strided_slice %95 {offsets = [1, 0, 0], sizes = [1, 96, 128], strides = [1, 1, 1]} : vector<2x96x128xf32> to vector<1x96x128xf32>
    %99 = vector.shape_cast %98 : vector<1x96x128xf32> to vector<96x128xf32>
    %100 = arith.addf %97, %99 : vector<96x128xf32>
    %c64_i32_32 = arith.constant 64 : i32
    %101 = tpu.dynamic_rotate %100 by %c64_i32_32 dim 1 : vector<96x128xf32>, i32 -> vector<96x128xf32>
    %102 = arith.addf %100, %101 : vector<96x128xf32>
    %cst_33 = arith.constant 5.000000e-01 : f32
    %103 = vector.broadcast %cst_33 : f32 to vector<96x128xf32>
    %104 = arith.mulf %103, %102 : vector<96x128xf32>
    %105 = math.tanh %104 : vector<96x128xf32>
    %106 = vector.shape_cast %105 : vector<96x128xf32> to vector<1x96x128xf32>
    %107 = vector.broadcast %106 : vector<1x96x128xf32> to vector<2x96x128xf32>
    %108 = arith.mulf %62, %107 : vector<2x96x128xf32>
    %109 = vector.shape_cast %108 : vector<2x96x128xf32> to vector<192x128xf32>
    %110 = arith.truncf %109 : vector<192x128xf32> to vector<192x128xbf16>
    %cst_34 = arith.constant dense<0.000000e+00> : vector<192x128xf32>
    %111 = tpu.matmul %110, %2, %cst_34 {dimension_numbers = #tpu.dot_dimension_numbers<[1], [0], [0], [1], [0, 0, 1, 1], [], []>} : vector<192x128xbf16>, vector<128x128xbf16>, vector<192x128xf32> -> vector<192x128xf32>
    %112 = vector.shape_cast %111 : vector<192x128xf32> to vector<2x96x128xf32>
    %113 = vector.broadcast %28 : vector<1x96x128xf32> to vector<2x96x128xf32>
    %114 = arith.addf %95, %113 : vector<2x96x128xf32>
    %115 = arith.addf %114, %112 : vector<2x96x128xf32>
    %116 = arith.mulf %115, %41 : vector<2x96x128xf32>
    %117 = vector.extract_strided_slice %116 {offsets = [0, 0, 0], sizes = [1, 96, 128], strides = [1, 1, 1]} : vector<2x96x128xf32> to vector<1x96x128xf32>
    %118 = vector.shape_cast %117 : vector<1x96x128xf32> to vector<96x128xf32>
    %119 = vector.extract_strided_slice %116 {offsets = [1, 0, 0], sizes = [1, 96, 128], strides = [1, 1, 1]} : vector<2x96x128xf32> to vector<1x96x128xf32>
    %120 = vector.shape_cast %119 : vector<1x96x128xf32> to vector<96x128xf32>
    %121 = arith.addf %118, %120 : vector<96x128xf32>
    %c64_i32_35 = arith.constant 64 : i32
    %122 = tpu.dynamic_rotate %121 by %c64_i32_35 dim 1 : vector<96x128xf32>, i32 -> vector<96x128xf32>
    %123 = arith.addf %121, %122 : vector<96x128xf32>
    %cst_36 = arith.constant 5.000000e-01 : f32
    %124 = vector.broadcast %cst_36 : f32 to vector<96x128xf32>
    %125 = arith.mulf %124, %123 : vector<96x128xf32>
    %126 = math.tanh %125 : vector<96x128xf32>
    %127 = arith.truncf %126 : vector<96x128xf32> to vector<96x128xbf16>
    %cst_37 = arith.constant dense<0.000000e+00> : vector<96x128xf32>
    %128 = tpu.matmul %127, %4, %cst_37 {dimension_numbers = #tpu.dot_dimension_numbers<[1], [0], [0], [1], [0, 0, 1, 1], [], []>} : vector<96x128xbf16>, vector<128x128xbf16>, vector<96x128xf32> -> vector<96x128xf32>
    %cst_38 = arith.constant 0.000000e+00 : f32
    %129 = vector.broadcast %cst_38 : f32 to vector<96x128xf32>
    %130 = arith.cmpf oge, %128, %129 : vector<96x128xf32>
    %cst_39 = arith.constant 2.000000e-01 : f32
    %131 = vector.broadcast %cst_39 : f32 to vector<96x128xf32>
    %132 = arith.mulf %131, %128 : vector<96x128xf32>
    %133 = arith.select %130, %128, %132 : vector<96x128xi1>, vector<96x128xf32>
    %134 = arith.truncf %133 : vector<96x128xf32> to vector<96x128xbf16>
    %cst_40 = arith.constant dense<0.000000e+00> : vector<96x128xf32>
    %135 = tpu.matmul %134, %5, %cst_40 {dimension_numbers = #tpu.dot_dimension_numbers<[1], [0], [0], [1], [0, 0, 1, 1], [], []>} : vector<96x128xbf16>, vector<128x128xbf16>, vector<96x128xf32> -> vector<96x128xf32>
    %136 = vector.broadcast %6 : vector<1x128xf32> to vector<96x128xf32>
    %137 = arith.addf %135, %136 : vector<96x128xf32>
    %cst_41 = arith.constant 0.000000e+00 : f32
    %138 = vector.broadcast %cst_41 : f32 to vector<96x128xf32>
    %139 = arith.cmpf oge, %137, %138 : vector<96x128xf32>
    %cst_42 = arith.constant 2.000000e-01 : f32
    %140 = vector.broadcast %cst_42 : f32 to vector<96x128xf32>
    %141 = arith.mulf %140, %137 : vector<96x128xf32>
    %142 = arith.select %139, %137, %141 : vector<96x128xi1>, vector<96x128xf32>
    %143 = vector.broadcast %7 : vector<1x128xf32> to vector<96x128xf32>
    %144 = arith.mulf %142, %143 : vector<96x128xf32>
    %cst_43 = arith.constant dense<0.000000e+00> : vector<96xf32>
    %145 = vector.multi_reduction <add>, %144, %cst_43 [1] : vector<96x128xf32> to vector<96xf32>
    %146 = vector.shape_cast %145 : vector<96xf32> to vector<96x1xf32>
    %147 = vector.broadcast %146 : vector<96x1xf32> to vector<96x128xf32>
    %148 = vector.broadcast %8 : vector<1x128xf32> to vector<96x128xf32>
    %149 = arith.addf %147, %148 : vector<96x128xf32>
    %c0_44 = arith.constant 0 : index
    %c0_45 = arith.constant 0 : index
    %150 = vector.load %arg10[%c0_44, %c0_45] : memref<96x128xf32, #tpu.memory_space<vmem>>, vector<96x128xf32>
    tpu.vector_store %arg10[%c0_44, %c0_45], %149 {strides = array<i32>} : memref<96x128xf32, #tpu.memory_space<vmem>>, vector<96x128xf32>,
    return
  }
  func.func @transform_0(%arg0: i32) -> (i32, i32) {
    %c0_i32 = arith.constant 0 : i32
    %c0_i32_0 = arith.constant 0 : i32
    return %arg0, %c0_i32 : i32, i32
  }
  func.func @transform_1(%arg0: i32) -> (i32, i32) {
    %c0_i32 = arith.constant 0 : i32
    %c0_i32_0 = arith.constant 0 : i32
    %c0_i32_1 = arith.constant 0 : i32
    return %c0_i32, %c0_i32_0 : i32, i32
  }
  func.func @transform_2(%arg0: i32) -> (i32, i32) {
    %c0_i32 = arith.constant 0 : i32
    %c0_i32_0 = arith.constant 0 : i32
    %c0_i32_1 = arith.constant 0 : i32
    return %c0_i32, %c0_i32_0 : i32, i32
  }
  func.func @transform_3(%arg0: i32) -> (i32, i32) {
    %c0_i32 = arith.constant 0 : i32
    %c0_i32_0 = arith.constant 0 : i32
    %c0_i32_1 = arith.constant 0 : i32
    return %c0_i32, %c0_i32_0 : i32, i32
  }
  func.func @transform_4(%arg0: i32) -> (i32, i32) {
    %c0_i32 = arith.constant 0 : i32
    %c0_i32_0 = arith.constant 0 : i32
    %c0_i32_1 = arith.constant 0 : i32
    return %c0_i32, %c0_i32_0 : i32, i32
  }
  func.func @transform_5(%arg0: i32) -> (i32, i32) {
    %c0_i32 = arith.constant 0 : i32
    %c0_i32_0 = arith.constant 0 : i32
    %c0_i32_1 = arith.constant 0 : i32
    return %c0_i32, %c0_i32_0 : i32, i32
  }
  func.func @transform_6(%arg0: i32) -> (i32, i32) {
    %c0_i32 = arith.constant 0 : i32
    %c0_i32_0 = arith.constant 0 : i32
    %c0_i32_1 = arith.constant 0 : i32
    return %c0_i32, %c0_i32_0 : i32, i32
  }
  func.func @transform_7(%arg0: i32) -> (i32, i32) {
    %c0_i32 = arith.constant 0 : i32
    %c0_i32_0 = arith.constant 0 : i32
    %c0_i32_1 = arith.constant 0 : i32
    return %c0_i32, %c0_i32_0 : i32, i32
  }
  func.func @transform_8(%arg0: i32) -> (i32, i32) {
    %c0_i32 = arith.constant 0 : i32
    %c0_i32_0 = arith.constant 0 : i32
    %c0_i32_1 = arith.constant 0 : i32
    return %c0_i32, %c0_i32_0 : i32, i32
  }
  func.func @transform_9(%arg0: i32) -> (i32, i32) {
    %c0_i32 = arith.constant 0 : i32
    %c0_i32_0 = arith.constant 0 : i32
    return %arg0, %c0_i32 : i32, i32
  }
}

</mosaic_0001>

<llo_original>
// kernel: tpu_custom_call.1
$region0: #{tpu_custom_call.1}
  #allocation0 [shape = 'u32[]', space=smem, size = 0x4, offset = 0x4, fixed_abs, tag = 'smem constant byte address 0x4 - core index']
  #allocation1 [shape = 'u32[144,128]{1,0:T(1,128)}', space=vmem, size = 0x12000, scoped, tag = 'internal scratch']
  %s0 = inlined_call_operand.hbm [shape: f32[96,128], index: 0, kind: input, shape index: {}]
  %s1 = inlined_call_operand.hbm [shape: bf16[256,128], index: 1, kind: input, shape index: {}]
  %s2 = inlined_call_operand.hbm [shape: bf16[128,128], index: 2, kind: input, shape index: {}]
  %s3 = inlined_call_operand.hbm [shape: bf16[128,128], index: 3, kind: input, shape index: {}]
  %s4 = inlined_call_operand.hbm [shape: bf16[128,128], index: 4, kind: input, shape index: {}]
  %s5 = inlined_call_operand.hbm [shape: bf16[128,128], index: 5, kind: input, shape index: {}]
  %s6 = inlined_call_operand.vmem [shape: f32[1,128], index: 6, kind: input, shape index: {}]
  %s7 = inlined_call_operand.vmem [shape: f32[1,128], index: 7, kind: input, shape index: {}]
  %s8 = inlined_call_operand.vmem [shape: f32[1,128], index: 8, kind: input, shape index: {}]
  %s9 = inlined_call_operand.hbm [shape: f32[96,128], index: 9, kind: output, shape index: {}]
  %s10 = sld [smem:[#allocation0]]
  $region70: #{tpu_custom_call.1} parent=0
    _
  %s12 = ssub.s32 1, %s10
  %s13 = scalar_select 0, %s12, %s10
  $region1: #{tpu_custom_call.1} parent=0
    #allocation2 [shape = 'u8[49152]{0}', space=vmem, size = 0xc000, scoped, tag = 'input window, operand 0, single buffered']
    #allocation3 [shape = 's32[1]{0}', space=sflag, size = 0x4, scoped, tag = 'scoped memory for tpu_custom_call.1']
    #allocation4 [shape = 's32[1]{0}', space=sflag, size = 0x4, scoped, tag = 'scoped memory for tpu_custom_call.1']
    #allocation5 [shape = 'u8[65536]{0}', space=vmem, size = 0x10000, scoped, tag = 'input window, operand 1, single buffered']
    #allocation6 [shape = 's32[1]{0}', space=sflag, size = 0x4, scoped, tag = 'scoped memory for tpu_custom_call.1']
    #allocation7 [shape = 'u8[32768]{0}', space=vmem, size = 0x8000, scoped, tag = 'input window, operand 2, single buffered']
    #allocation8 [shape = 'u8[32768]{0}', space=vmem, size = 0x8000, scoped, tag = 'input window, operand 3, single buffered']
    #allocation9 [shape = 's32[1]{0}', space=sflag, size = 0x4, scoped, tag = 'scoped memory for tpu_custom_call.1']
    #allocation10 [shape = 'u8[32768]{0}', space=vmem, size = 0x8000, scoped, tag = 'input window, operand 4, single buffered']
    #allocation11 [shape = 'u8[32768]{0}', space=vmem, size = 0x8000, scoped, tag = 'input window, operand 5, single buffered']
    #allocation12 [shape = 's32[1]{0}', space=sflag, size = 0x4, scoped, tag = 'scoped memory for tpu_custom_call.1']
    #allocation13 [shape = 'u8[49152]{0}', space=vmem, size = 0xc000, scoped, tag = 'output window, operand 0, single buffered']
    %14 = vsyncpa [#allocation3], 0
    %15 = vsyncpa [#allocation6], 0
    %16 = vsyncpa [#allocation9], 0
    %17 = vsyncpa [#allocation12], 0
    %18 = vsyncpa [#allocation4], 0
    // Predicated region
    $region2: #{tpu_custom_call.1} parent=1 // pred_check
      _
    $region3: #{tpu_custom_call.1} parent=1 // pred_check_branch
      %20 = sbr.rel (0) target = $region5
    $region4: #{tpu_custom_call.1} parent=1 // pred_region
      %s22 = ssub.s32 1536, 1536
      %23 = vsyncadd [#allocation3], %s22
      %s24 = sshll.u32 [#allocation2], 4
      %s25 = int_to_ptr.vmem [resolvable:$true] %s24
      %30 = dma.hbm_to_vmem [thread:$0]  %s0, 1536, %s25, [#allocation3], 128, 128, 8
    $region5: #{tpu_custom_call.1} parent=1 // pred_fallthru
      _
    // Predicated region
    $region6: #{tpu_custom_call.1} parent=1 // pred_check
      _
    $region7: #{tpu_custom_call.1} parent=1 // pred_check_branch
      %32 = sbr.rel (0) target = $region9
    $region8: #{tpu_custom_call.1} parent=1 // pred_region
      %s34 = ssub.s32 2048, 2048
      %35 = vsyncadd [#allocation6], %s34
      %s36 = sshll.u32 [#allocation5], 4
      %s37 = int_to_ptr.vmem [resolvable:$true] %s36
      %42 = dma.hbm_to_vmem [thread:$0]  %s1, 2048, %s37, [#allocation6], 64, 64, 4
    $region9: #{tpu_custom_call.1} parent=1 // pred_fallthru
      _
    // Predicated region
    $region10: #{tpu_custom_call.1} parent=1 // pred_check
      _
    $region11: #{tpu_custom_call.1} parent=1 // pred_check_branch
      %44 = sbr.rel (0) target = $region13
    $region12: #{tpu_custom_call.1} parent=1 // pred_region
      %s46 = ssub.s32 1024, 1024
      %47 = vsyncadd [#allocation6], %s46
      %s48 = sshll.u32 [#allocation7], 4
      %s49 = int_to_ptr.vmem [resolvable:$true] %s48
      %54 = dma.hbm_to_vmem [thread:$0]  %s2, 1024, %s49, [#allocation6], 64, 64, 4
    $region13: #{tpu_custom_call.1} parent=1 // pred_fallthru
      _
    // Predicated region
    $region14: #{tpu_custom_call.1} parent=1 // pred_check
      _
    $region15: #{tpu_custom_call.1} parent=1 // pred_check_branch
      %56 = sbr.rel (0) target = $region17
    $region16: #{tpu_custom_call.1} parent=1 // pred_region
      %s58 = ssub.s32 1024, 1024
      %59 = vsyncadd [#allocation9], %s58
      %s60 = sshll.u32 [#allocation8], 4
      %s61 = int_to_ptr.vmem [resolvable:$true] %s60
      %66 = dma.hbm_to_vmem [thread:$0]  %s3, 1024, %s61, [#allocation9], 64, 64, 4
    $region17: #{tpu_custom_call.1} parent=1 // pred_fallthru
      _
    // Predicated region
    $region18: #{tpu_custom_call.1} parent=1 // pred_check
      _
    $region19: #{tpu_custom_call.1} parent=1 // pred_check_branch
      %68 = sbr.rel (0) target = $region21
    $region20: #{tpu_custom_call.1} parent=1 // pred_region
      %s70 = ssub.s32 1024, 1024
      %71 = vsyncadd [#allocation9], %s70
      %s72 = sshll.u32 [#allocation10], 4
      %s73 = int_to_ptr.vmem [resolvable:$true] %s72
      %78 = dma.hbm_to_vmem [thread:$0]  %s4, 1024, %s73, [#allocation9], 64, 64, 4
    $region21: #{tpu_custom_call.1} parent=1 // pred_fallthru
      _
    // Predicated region
    $region22: #{tpu_custom_call.1} parent=1 // pred_check
      _
    $region23: #{tpu_custom_call.1} parent=1 // pred_check_branch
      %80 = sbr.rel (0) target = $region25
    $region24: #{tpu_custom_call.1} parent=1 // pred_region
      %s82 = ssub.s32 1024, 1024
      %83 = vsyncadd [#allocation12], %s82
      %s84 = sshll.u32 [#allocation11], 4
      %s85 = int_to_ptr.vmem [resolvable:$true] %s84
      %90 = dma.hbm_to_vmem [thread:$0]  %s5, 1024, %s85, [#allocation12], 64, 64, 4
    $region25: #{tpu_custom_call.1} parent=1 // pred_fallthru
      _
    // Predicated region
    $region26: #{tpu_custom_call.1} parent=1 // pred_check
      _
    $region27: #{tpu_custom_call.1} parent=1 // pred_check_branch
      %92 = sbr.rel (0) target = $region29
    $region28: #{tpu_custom_call.1} parent=1 // pred_region
      _
    $region29: #{tpu_custom_call.1} parent=1 // pred_fallthru
      _
    // Predicated region
    $region30: #{tpu_custom_call.1} parent=1 // pred_check
      _
    $region31: #{tpu_custom_call.1} parent=1 // pred_check_branch
      %94 = sbr.rel (0) target = $region33
    $region32: #{tpu_custom_call.1} parent=1 // pred_region
      _
    $region33: #{tpu_custom_call.1} parent=1 // pred_fallthru
      _
    // Predicated region
    $region34: #{tpu_custom_call.1} parent=1 // pred_check
      _
    $region35: #{tpu_custom_call.1} parent=1 // pred_check_branch
      %96 = sbr.rel (0) target = $region37
    $region36: #{tpu_custom_call.1} parent=1 // pred_region
      _
    $region37: #{tpu_custom_call.1} parent=1 // pred_fallthru
      _
    // Predicated region
    $region38: #{tpu_custom_call.1} parent=1 // pred_check
      _
    $region39: #{tpu_custom_call.1} parent=1 // pred_check_branch
      %98 = sbr.rel (0) target = $region41
    $region40: #{tpu_custom_call.1} parent=1 // pred_region
      %99 = dma.done [#allocation3], 1536
    $region41: #{tpu_custom_call.1} parent=1 // pred_fallthru
      _
    // Predicated region
    $region42: #{tpu_custom_call.1} parent=1 // pred_check
      _
    $region43: #{tpu_custom_call.1} parent=1 // pred_check_branch
      %101 = sbr.rel (0) target = $region45
    $region44: #{tpu_custom_call.1} parent=1 // pred_region
      %102 = dma.done [#allocation6], 2048
    $region45: #{tpu_custom_call.1} parent=1 // pred_fallthru
      _
    // Predicated region
    $region46: #{tpu_custom_call.1} parent=1 // pred_check
      _
    $region47: #{tpu_custom_call.1} parent=1 // pred_check_branch
      %104 = sbr.rel (0) target = $region49
    $region48: #{tpu_custom_call.1} parent=1 // pred_region
      %105 = dma.done [#allocation6], 1024
    $region49: #{tpu_custom_call.1} parent=1 // pred_fallthru
      _
    // Predicated region
    $region50: #{tpu_custom_call.1} parent=1 // pred_check
      _
    $region51: #{tpu_custom_call.1} parent=1 // pred_check_branch
      %107 = sbr.rel (0) target = $region53
    $region52: #{tpu_custom_call.1} parent=1 // pred_region
      %108 = dma.done [#allocation9], 1024
    $region53: #{tpu_custom_call.1} parent=1 // pred_fallthru
      _
    // Predicated region
    $region54: #{tpu_custom_call.1} parent=1 // pred_check
      _
    $region55: #{tpu_custom_call.1} parent=1 // pred_check_branch
      %110 = sbr.rel (0) target = $region57
    $region56: #{tpu_custom_call.1} parent=1 // pred_region
      %111 = dma.done [#allocation9], 1024
    $region57: #{tpu_custom_call.1} parent=1 // pred_fallthru
      _
    // Predicated region
    $region58: #{tpu_custom_call.1} parent=1 // pred_check
      _
    $region59: #{tpu_custom_call.1} parent=1 // pred_check_branch
      %113 = sbr.rel (0) target = $region61
    $region60: #{tpu_custom_call.1} parent=1 // pred_region
      %114 = dma.done [#allocation12], 1024
    $region61: #{tpu_custom_call.1} parent=1 // pred_fallthru
      _
    %v116 = vld [vmem:[#allocation2] sm:$0xff]
    %v117 = vld [vmem:[#allocation2 + $0x8] sm:$0xff]
    %v118 = vld [vmem:[#allocation2 + $0x10] sm:$0xff]
    %v119 = vld [vmem:[#allocation2 + $0x18] sm:$0xff]
    %v120 = vld [vmem:[#allocation2 + $0x20] sm:$0xff]
    %v121 = vld [vmem:[#allocation2 + $0x28] sm:$0xff]
    %v122 = vld [vmem:[#allocation2 + $0x30] sm:$0xff]
    %v123 = vld [vmem:[#allocation2 + $0x38] sm:$0xff]
    %v124 = vld [vmem:[#allocation2 + $0x40] sm:$0xff]
    %v125 = vld [vmem:[#allocation2 + $0x48] sm:$0xff]
    %v126 = vld [vmem:[#allocation2 + $0x50] sm:$0xff]
    %v127 = vld [vmem:[#allocation2 + $0x58] sm:$0xff]
    %v128 = vld [vmem:[#allocation5] sm:$0xf]
    %v129 = vld [vmem:[#allocation5 + $0x4] sm:$0xf]
    %v130 = vld [vmem:[#allocation5 + $0x8] sm:$0xf]
    %v131 = vld [vmem:[#allocation5 + $0xc] sm:$0xf]
    %v132 = vld [vmem:[#allocation5 + $0x10] sm:$0xf]
    %v133 = vld [vmem:[#allocation5 + $0x14] sm:$0xf]
    %v134 = vld [vmem:[#allocation5 + $0x18] sm:$0xf]
    %v135 = vld [vmem:[#allocation5 + $0x1c] sm:$0xf]
    %v136 = vld [vmem:[#allocation5 + $0x20] sm:$0xf]
    %v137 = vld [vmem:[#allocation5 + $0x24] sm:$0xf]
    %v138 = vld [vmem:[#allocation5 + $0x28] sm:$0xf]
    %v139 = vld [vmem:[#allocation5 + $0x2c] sm:$0xf]
    %v140 = vld [vmem:[#allocation5 + $0x30] sm:$0xf]
    %v141 = vld [vmem:[#allocation5 + $0x34] sm:$0xf]
    %v142 = vld [vmem:[#allocation5 + $0x38] sm:$0xf]
    %v143 = vld [vmem:[#allocation5 + $0x3c] sm:$0xf]
    %v144 = vld [vmem:[#allocation5 + $0x40] sm:$0xf]
    %v145 = vld [vmem:[#allocation5 + $0x44] sm:$0xf]
    %v146 = vld [vmem:[#allocation5 + $0x48] sm:$0xf]
    %v147 = vld [vmem:[#allocation5 + $0x4c] sm:$0xf]
    %v148 = vld [vmem:[#allocation5 + $0x50] sm:$0xf]
    %v149 = vld [vmem:[#allocation5 + $0x54] sm:$0xf]
    %v150 = vld [vmem:[#allocation5 + $0x58] sm:$0xf]
    %v151 = vld [vmem:[#allocation5 + $0x5c] sm:$0xf]
    %v152 = vld [vmem:[#allocation5 + $0x60] sm:$0xf]
    %v153 = vld [vmem:[#allocation5 + $0x64] sm:$0xf]
    %v154 = vld [vmem:[#allocation5 + $0x68] sm:$0xf]
    %v155 = vld [vmem:[#allocation5 + $0x6c] sm:$0xf]
    %v156 = vld [vmem:[#allocation5 + $0x70] sm:$0xf]
    %v157 = vld [vmem:[#allocation5 + $0x74] sm:$0xf]
    %v158 = vld [vmem:[#allocation5 + $0x78] sm:$0xf]
    %v159 = vld [vmem:[#allocation5 + $0x7c] sm:$0xf]
    %v160 = vld [vmem:[#allocation7] sm:$0xf]
    %v161 = vld [vmem:[#allocation7 + $0x4] sm:$0xf]
    %v162 = vld [vmem:[#allocation7 + $0x8] sm:$0xf]
    %v163 = vld [vmem:[#allocation7 + $0xc] sm:$0xf]
    %v164 = vld [vmem:[#allocation7 + $0x10] sm:$0xf]
    %v165 = vld [vmem:[#allocation7 + $0x14] sm:$0xf]
    %v166 = vld [vmem:[#allocation7 + $0x18] sm:$0xf]
    %v167 = vld [vmem:[#allocation7 + $0x1c] sm:$0xf]
    %v168 = vld [vmem:[#allocation7 + $0x20] sm:$0xf]
    %v169 = vld [vmem:[#allocation7 + $0x24] sm:$0xf]
    %v170 = vld [vmem:[#allocation7 + $0x28] sm:$0xf]
    %v171 = vld [vmem:[#allocation7 + $0x2c] sm:$0xf]
    %v172 = vld [vmem:[#allocation7 + $0x30] sm:$0xf]
    %v173 = vld [vmem:[#allocation7 + $0x34] sm:$0xf]
    %v174 = vld [vmem:[#allocation7 + $0x38] sm:$0xf]
    %v175 = vld [vmem:[#allocation7 + $0x3c] sm:$0xf]
    %v176 = vld [vmem:[#allocation8] sm:$0xf]
    %v177 = vld [vmem:[#allocation8 + $0x4] sm:$0xf]
    %v178 = vld [vmem:[#allocation8 + $0x8] sm:$0xf]
    %v179 = vld [vmem:[#allocation8 + $0xc] sm:$0xf]
    %v180 = vld [vmem:[#allocation8 + $0x10] sm:$0xf]
    %v181 = vld [vmem:[#allocation8 + $0x14] sm:$0xf]
    %v182 = vld [vmem:[#allocation8 + $0x18] sm:$0xf]
    %v183 = vld [vmem:[#allocation8 + $0x1c] sm:$0xf]
    %v184 = vld [vmem:[#allocation8 + $0x20] sm:$0xf]
    %v185 = vld [vmem:[#allocation8 + $0x24] sm:$0xf]
    %v186 = vld [vmem:[#allocation8 + $0x28] sm:$0xf]
    %v187 = vld [vmem:[#allocation8 + $0x2c] sm:$0xf]
    %v188 = vld [vmem:[#allocation8 + $0x30] sm:$0xf]
    %v189 = vld [vmem:[#allocation8 + $0x34] sm:$0xf]
    %v190 = vld [vmem:[#allocation8 + $0x38] sm:$0xf]
    %v191 = vld [vmem:[#allocation8 + $0x3c] sm:$0xf]
    %v192 = vld [vmem:[#allocation10] sm:$0xf]
    %v193 = vld [vmem:[#allocation10 + $0x4] sm:$0xf]
    %v194 = vld [vmem:[#allocation10 + $0x8] sm:$0xf]
    %v195 = vld [vmem:[#allocation10 + $0xc] sm:$0xf]
    %v196 = vld [vmem:[#allocation10 + $0x10] sm:$0xf]
    %v197 = vld [vmem:[#allocation10 + $0x14] sm:$0xf]
    %v198 = vld [vmem:[#allocation10 + $0x18] sm:$0xf]
    %v199 = vld [vmem:[#allocation10 + $0x1c] sm:$0xf]
    %v200 = vld [vmem:[#allocation10 + $0x20] sm:$0xf]
    %v201 = vld [vmem:[#allocation10 + $0x24] sm:$0xf]
    %v202 = vld [vmem:[#allocation10 + $0x28] sm:$0xf]
    %v203 = vld [vmem:[#allocation10 + $0x2c] sm:$0xf]
    %v204 = vld [vmem:[#allocation10 + $0x30] sm:$0xf]
    %v205 = vld [vmem:[#allocation10 + $0x34] sm:$0xf]
    %v206 = vld [vmem:[#allocation10 + $0x38] sm:$0xf]
    %v207 = vld [vmem:[#allocation10 + $0x3c] sm:$0xf]
    %v208 = vld [vmem:[#allocation11] sm:$0xf]
    %v209 = vld [vmem:[#allocation11 + $0x4] sm:$0xf]
    %v210 = vld [vmem:[#allocation11 + $0x8] sm:$0xf]
    %v211 = vld [vmem:[#allocation11 + $0xc] sm:$0xf]
    %v212 = vld [vmem:[#allocation11 + $0x10] sm:$0xf]
    %v213 = vld [vmem:[#allocation11 + $0x14] sm:$0xf]
    %v214 = vld [vmem:[#allocation11 + $0x18] sm:$0xf]
    %v215 = vld [vmem:[#allocation11 + $0x1c] sm:$0xf]
    %v216 = vld [vmem:[#allocation11 + $0x20] sm:$0xf]
    %v217 = vld [vmem:[#allocation11 + $0x24] sm:$0xf]
    %v218 = vld [vmem:[#allocation11 + $0x28] sm:$0xf]
    %v219 = vld [vmem:[#allocation11 + $0x2c] sm:$0xf]
    %v220 = vld [vmem:[#allocation11 + $0x30] sm:$0xf]
    %v221 = vld [vmem:[#allocation11 + $0x34] sm:$0xf]
    %v222 = vld [vmem:[#allocation11 + $0x38] sm:$0xf]
    %v223 = vld [vmem:[#allocation11 + $0x3c] sm:$0xf]
    %v224 = vld [vmem:[%s6] sm:$0x1]
    %v225 = vld [vmem:[%s7] sm:$0x1]
    %v226 = vld [vmem:[%s8] sm:$0x1]
    %v227 = vlaneseq
    %v228 = vand.u32 %v227, 127
    %v229 = vand.u32 %v228, 63
    %vm230 = vcmp.lt.s32.totalorder %v229, 60
    %v231 = vsel %vm230, 1, 0
    %v232 = vcvt.s32.f32 %v231
    %vm233 = vcmp.ge.s32.totalorder %v228, 64
    %v234 = vsel %vm233, 1, 0
    %v235 = vcvt.s32.f32 %v234
    %v236 = vadd.f32 %v235, 1.0
    %vm237 = vcmp.eq.f32.partialorder %v116, 0.0
    %vm238 = vcmp.eq.f32.partialorder %v117, 0.0
    %vm239 = vcmp.eq.f32.partialorder %v118, 0.0
    %vm240 = vcmp.eq.f32.partialorder %v119, 0.0
    %vm241 = vcmp.eq.f32.partialorder %v120, 0.0
    %vm242 = vcmp.eq.f32.partialorder %v121, 0.0
    %vm243 = vcmp.eq.f32.partialorder %v122, 0.0
    %vm244 = vcmp.eq.f32.partialorder %v123, 0.0
    %vm245 = vcmp.eq.f32.partialorder %v124, 0.0
    %vm246 = vcmp.eq.f32.partialorder %v125, 0.0
    %vm247 = vcmp.eq.f32.partialorder %v126, 0.0
    %vm248 = vcmp.eq.f32.partialorder %v127, 0.0
    %v249 = vsel %vm237, %v232, 0.0
    %v250 = vsel %vm238, %v232, 0.0
    %v251 = vsel %vm239, %v232, 0.0
    %v252 = vsel %vm240, %v232, 0.0
    %v253 = vsel %vm241, %v232, 0.0
    %v254 = vsel %vm242, %v232, 0.0
    %v255 = vsel %vm243, %v232, 0.0
    %v256 = vsel %vm244, %v232, 0.0
    %v257 = vsel %vm245, %v232, 0.0
    %v258 = vsel %vm246, %v232, 0.0
    %v259 = vsel %vm247, %v232, 0.0
    %v260 = vsel %vm248, %v232, 0.0
    %v261 = vpack.c.bf16 %v250, %v249
    %v262 = vpack.c.bf16 %v252, %v251
    %v263 = vpack.c.bf16 %v254, %v253
    %v264 = vpack.c.bf16 %v256, %v255
    %v265 = vpack.c.bf16 %v258, %v257
    %v266 = vpack.c.bf16 %v260, %v259
    %v283 = vunpack.c.l.b16 %v176
    %v284 = vunpack.c.l.b16 %v177
    %v285 = vunpack.c.l.b16 %v178
    %v286 = vunpack.c.l.b16 %v179
    %v287 = vunpack.c.l.b16 %v180
    %v288 = vunpack.c.l.b16 %v181
    %v289 = vunpack.c.l.b16 %v182
    %v290 = vunpack.c.l.b16 %v183
    %v291 = vunpack.c.l.b16 %v184
    %v292 = vunpack.c.l.b16 %v185
    %v293 = vunpack.c.l.b16 %v186
    %v294 = vunpack.c.l.b16 %v187
    %v295 = vunpack.c.l.b16 %v188
    %v296 = vunpack.c.l.b16 %v189
    %v297 = vunpack.c.l.b16 %v190
    %v298 = vunpack.c.l.b16 %v191
    %v299 = vpack.c.b16 %v284, %v283
    %v300 = vpack.c.b16 %v286, %v285
    %v301 = vpack.c.b16 %v288, %v287
    %v302 = vpack.c.b16 %v290, %v289
    %v303 = vpack.c.b16 %v292, %v291
    %v304 = vpack.c.b16 %v294, %v293
    %v305 = vpack.c.b16 %v296, %v295
    %v306 = vpack.c.b16 %v298, %v297
    %315 = vmatprep.subr.bf16.mxu0 0
    %316 = vmatpush1.bf16.msra.mxu0 %v299
    %317 = vmatprep.subr.bf16.mxu0 0
    %318 = vmatpush1.bf16.msra.mxu0 %v300
    %319 = vmatprep.subr.bf16.mxu0 0
    %320 = vmatpush1.bf16.msra.mxu0 %v301
    %321 = vmatprep.subr.bf16.mxu0 0
    %322 = vmatpush1.bf16.msra.mxu0 %v302
    %323 = vmatprep.subr.bf16.mxu0 0
    %324 = vmatpush1.bf16.msra.mxu0 %v303
    %325 = vmatprep.subr.bf16.mxu0 0
    %326 = vmatpush1.bf16.msra.mxu0 %v304
    %327 = vmatprep.subr.bf16.mxu0 0
    %328 = vmatpush1.bf16.msra.mxu0 %v305
    %329 = vmatprep.subr.bf16.mxu0 0
    %330 = vmatpush1.bf16.msra.mxu0 %v306
    %331 = vmatprep.subr.bf16.mxu0 0
    %332 = vmatpush1.bf16.msra.mxu0 0
    %333 = vmatprep.subr.bf16.mxu0 0
    %334 = vmatpush1.bf16.msra.mxu0 0
    %335 = vmatprep.subr.bf16.mxu0 0
    %336 = vmatpush1.bf16.msra.mxu0 0
    %337 = vmatprep.subr.bf16.mxu0 0
    %338 = vmatpush1.bf16.msra.mxu0 0
    %339 = vmatprep.subr.bf16.mxu0 0
    %340 = vmatpush1.bf16.msra.mxu0 0
    %341 = vmatprep.subr.bf16.mxu0 0
    %342 = vmatpush1.bf16.msra.mxu0 0
    %343 = vmatprep.subr.bf16.mxu0 0
    %344 = vmatpush1.bf16.msra.mxu0 0
    %345 = vmatprep.subr.bf16.mxu0 0
    %346 = vmatpush1.bf16.msra.mxu0 0
    %347 = vmatprep.mubr.bf16.mxu0 0
    %348 = vmatmul.mubr.bf16.gmra.mrb[0].mxu0 %v261
    %v349 = vpop.f32.mrb[0].mxu0
    %v350 = vadd.f32 0.0, %v349
    %v351 = vpop.f32.mrb[0].mxu0
    %v352 = vpop.f32.mrb[0].mxu0
    %v353 = vadd.f32 0.0, %v352
    %v354 = vpop.f32.mrb[0].mxu0
    %355 = vmatprep.mubr.bf16.mxu0 0
    %356 = vmatmul.mubr.bf16.gmra.mrb[0].mxu0 %v262
    %v357 = vpop.f32.mrb[0].mxu0
    %v358 = vadd.f32 0.0, %v357
    %v359 = vpop.f32.mrb[0].mxu0
    %v360 = vpop.f32.mrb[0].mxu0
    %v361 = vadd.f32 0.0, %v360
    %v362 = vpop.f32.mrb[0].mxu0
    %363 = vmatprep.mubr.bf16.mxu0 0
    %364 = vmatmul.mubr.bf16.gmra.mrb[0].mxu0 %v263
    %v365 = vpop.f32.mrb[0].mxu0
    %v366 = vadd.f32 0.0, %v365
    %v367 = vpop.f32.mrb[0].mxu0
    %v368 = vpop.f32.mrb[0].mxu0
    %v369 = vadd.f32 0.0, %v368
    %v370 = vpop.f32.mrb[0].mxu0
    %371 = vmatprep.mubr.bf16.mxu0 0
    %372 = vmatmul.mubr.bf16.gmra.mrb[0].mxu0 %v264
    %v373 = vpop.f32.mrb[0].mxu0
    %v374 = vadd.f32 0.0, %v373
    %v375 = vpop.f32.mrb[0].mxu0
    %v376 = vpop.f32.mrb[0].mxu0
    %v377 = vadd.f32 0.0, %v376
    %v378 = vpop.f32.mrb[0].mxu0
    %379 = vmatprep.mubr.bf16.mxu0 0
    %380 = vmatmul.mubr.bf16.gmra.mrb[0].mxu0 %v265
    %v381 = vpop.f32.mrb[0].mxu0
    %v382 = vadd.f32 0.0, %v381
    %v383 = vpop.f32.mrb[0].mxu0
    %v384 = vpop.f32.mrb[0].mxu0
    %v385 = vadd.f32 0.0, %v384
    %v386 = vpop.f32.mrb[0].mxu0
    %387 = vmatprep.mubr.bf16.mxu0 0
    %388 = vmatmul.mubr.bf16.gmra.mrb[0].mxu0 %v266
    %v389 = vpop.f32.mrb[0].mxu0
    %v390 = vadd.f32 0.0, %v389
    %v391 = vpop.f32.mrb[0].mxu0
    %v392 = vpop.f32.mrb[0].mxu0
    %v393 = vadd.f32 0.0, %v392
    %v394 = vpop.f32.mrb[0].mxu0
    %395 = vdwg.mxu0
    %v396 = vadd.f32 %v236, 0.0
    %vm397 = vcmp.eq.f32.partialorder %v116, %v396
    %vm398 = vcmp.eq.f32.partialorder %v117, %v396
    %vm399 = vcmp.eq.f32.partialorder %v118, %v396
    %vm400 = vcmp.eq.f32.partialorder %v119, %v396
    %vm401 = vcmp.eq.f32.partialorder %v120, %v396
    %vm402 = vcmp.eq.f32.partialorder %v121, %v396
    %vm403 = vcmp.eq.f32.partialorder %v122, %v396
    %vm404 = vcmp.eq.f32.partialorder %v123, %v396
    %vm405 = vcmp.eq.f32.partialorder %v124, %v396
    %vm406 = vcmp.eq.f32.partialorder %v125, %v396
    %vm407 = vcmp.eq.f32.partialorder %v126, %v396
    %vm408 = vcmp.eq.f32.partialorder %v127, %v396
    %v409 = vsel %vm397, 1, 0
    %v410 = vsel %vm398, 1, 0
    %v411 = vsel %vm399, 1, 0
    %v412 = vsel %vm400, 1, 0
    %v413 = vsel %vm401, 1, 0
    %v414 = vsel %vm402, 1, 0
    %v415 = vsel %vm403, 1, 0
    %v416 = vsel %vm404, 1, 0
    %v417 = vsel %vm405, 1, 0
    %v418 = vsel %vm406, 1, 0
    %v419 = vsel %vm407, 1, 0
    %v420 = vsel %vm408, 1, 0
    %v421 = vcvt.s32.f32 %v409
    %v422 = vcvt.s32.f32 %v410
    %v423 = vcvt.s32.f32 %v411
    %v424 = vcvt.s32.f32 %v412
    %v425 = vcvt.s32.f32 %v413
    %v426 = vcvt.s32.f32 %v414
    %v427 = vcvt.s32.f32 %v415
    %v428 = vcvt.s32.f32 %v416
    %v429 = vcvt.s32.f32 %v417
    %v430 = vcvt.s32.f32 %v418
    %v431 = vcvt.s32.f32 %v419
    %v432 = vcvt.s32.f32 %v420
    %v433 = vadd.f32 %v236, 2.0
    %vm434 = vcmp.eq.f32.partialorder %v116, %v433
    %vm435 = vcmp.eq.f32.partialorder %v117, %v433
    %vm436 = vcmp.eq.f32.partialorder %v118, %v433
    %vm437 = vcmp.eq.f32.partialorder %v119, %v433
    %vm438 = vcmp.eq.f32.partialorder %v120, %v433
    %vm439 = vcmp.eq.f32.partialorder %v121, %v433
    %vm440 = vcmp.eq.f32.partialorder %v122, %v433
    %vm441 = vcmp.eq.f32.partialorder %v123, %v433
    %vm442 = vcmp.eq.f32.partialorder %v124, %v433
    %vm443 = vcmp.eq.f32.partialorder %v125, %v433
    %vm444 = vcmp.eq.f32.partialorder %v126, %v433
    %vm445 = vcmp.eq.f32.partialorder %v127, %v433
    %v446 = vsel %vm434, 1, 0
    %v447 = vsel %vm435, 1, 0
    %v448 = vsel %vm436, 1, 0
    %v449 = vsel %vm437, 1, 0
    %v450 = vsel %vm438, 1, 0
    %v451 = vsel %vm439, 1, 0
    %v452 = vsel %vm440, 1, 0
    %v453 = vsel %vm441, 1, 0
    %v454 = vsel %vm442, 1, 0
    %v455 = vsel %vm443, 1, 0
    %v456 = vsel %vm444, 1, 0
    %v457 = vsel %vm445, 1, 0
    %v458 = vcvt.s32.f32 %v446
    %v459 = vcvt.s32.f32 %v447
    %v460 = vcvt.s32.f32 %v448
    %v461 = vcvt.s32.f32 %v449
    %v462 = vcvt.s32.f32 %v450
    %v463 = vcvt.s32.f32 %v451
    %v464 = vcvt.s32.f32 %v452
    %v465 = vcvt.s32.f32 %v453
    %v466 = vcvt.s32.f32 %v454
    %v467 = vcvt.s32.f32 %v455
    %v468 = vcvt.s32.f32 %v456
    %v469 = vcvt.s32.f32 %v457
    %vm470 = vcmp.ne.f32.partialorder %v116, %v396
    %vm471 = vcmp.ne.f32.partialorder %v117, %v396
    %vm472 = vcmp.ne.f32.partialorder %v118, %v396
    %vm473 = vcmp.ne.f32.partialorder %v119, %v396
    %vm474 = vcmp.ne.f32.partialorder %v120, %v396
    %vm475 = vcmp.ne.f32.partialorder %v121, %v396
    %vm476 = vcmp.ne.f32.partialorder %v122, %v396
    %vm477 = vcmp.ne.f32.partialorder %v123, %v396
    %vm478 = vcmp.ne.f32.partialorder %v124, %v396
    %vm479 = vcmp.ne.f32.partialorder %v125, %v396
    %vm480 = vcmp.ne.f32.partialorder %v126, %v396
    %vm481 = vcmp.ne.f32.partialorder %v127, %v396
    %vm482 = vcmp.ne.f32.partialorder %v116, 0.0
    %vm483 = vcmp.ne.f32.partialorder %v117, 0.0
    %vm484 = vcmp.ne.f32.partialorder %v118, 0.0
    %vm485 = vcmp.ne.f32.partialorder %v119, 0.0
    %vm486 = vcmp.ne.f32.partialorder %v120, 0.0
    %vm487 = vcmp.ne.f32.partialorder %v121, 0.0
    %vm488 = vcmp.ne.f32.partialorder %v122, 0.0
    %vm489 = vcmp.ne.f32.partialorder %v123, 0.0
    %vm490 = vcmp.ne.f32.partialorder %v124, 0.0
    %vm491 = vcmp.ne.f32.partialorder %v125, 0.0
    %vm492 = vcmp.ne.f32.partialorder %v126, 0.0
    %vm493 = vcmp.ne.f32.partialorder %v127, 0.0
    %vm494 = vmand %vm470, %vm482
    %vm495 = vmand %vm471, %vm483
    %vm496 = vmand %vm472, %vm484
    %vm497 = vmand %vm473, %vm485
    %vm498 = vmand %vm474, %vm486
    %vm499 = vmand %vm475, %vm487
    %vm500 = vmand %vm476, %vm488
    %vm501 = vmand %vm477, %vm489
    %vm502 = vmand %vm478, %vm490
    %vm503 = vmand %vm479, %vm491
    %vm504 = vmand %vm480, %vm492
    %vm505 = vmand %vm481, %vm493
    %v506 = vsel %vm494, 1, 0
    %v507 = vsel %vm495, 1, 0
    %v508 = vsel %vm496, 1, 0
    %v509 = vsel %vm497, 1, 0
    %v510 = vsel %vm498, 1, 0
    %v511 = vsel %vm499, 1, 0
    %v512 = vsel %vm500, 1, 0
    %v513 = vsel %vm501, 1, 0
    %v514 = vsel %vm502, 1, 0
    %v515 = vsel %vm503, 1, 0
    %v516 = vsel %vm504, 1, 0
    %v517 = vsel %vm505, 1, 0
    %v518 = vcvt.s32.f32 %v506
    %v519 = vcvt.s32.f32 %v507
    %v520 = vcvt.s32.f32 %v508
    %v521 = vcvt.s32.f32 %v509
    %v522 = vcvt.s32.f32 %v510
    %v523 = vcvt.s32.f32 %v511
    %v524 = vcvt.s32.f32 %v512
    %v525 = vcvt.s32.f32 %v513
    %v526 = vcvt.s32.f32 %v514
    %v527 = vcvt.s32.f32 %v515
    %v528 = vcvt.s32.f32 %v516
    %v529 = vcvt.s32.f32 %v517
    %v530 = vmul.f32 %v518, %v232
    %v531 = vmul.f32 %v519, %v232
    %v532 = vmul.f32 %v520, %v232
    %v533 = vmul.f32 %v521, %v232
    %v534 = vmul.f32 %v522, %v232
    %v535 = vmul.f32 %v523, %v232
    %v536 = vmul.f32 %v524, %v232
    %v537 = vmul.f32 %v525, %v232
    %v538 = vmul.f32 %v526, %v232
    %v539 = vmul.f32 %v527, %v232
    %v540 = vmul.f32 %v528, %v232
    %v541 = vmul.f32 %v529, %v232
    %vm542 = vcmp.ne.f32.partialorder %v116, %v433
    %vm543 = vcmp.ne.f32.partialorder %v117, %v433
    %vm544 = vcmp.ne.f32.partialorder %v118, %v433
    %vm545 = vcmp.ne.f32.partialorder %v119, %v433
    %vm546 = vcmp.ne.f32.partialorder %v120, %v433
    %vm547 = vcmp.ne.f32.partialorder %v121, %v433
    %vm548 = vcmp.ne.f32.partialorder %v122, %v433
    %vm549 = vcmp.ne.f32.partialorder %v123, %v433
    %vm550 = vcmp.ne.f32.partialorder %v124, %v433
    %vm551 = vcmp.ne.f32.partialorder %v125, %v433
    %vm552 = vcmp.ne.f32.partialorder %v126, %v433
    %vm553 = vcmp.ne.f32.partialorder %v127, %v433
    %vm554 = vmand %vm542, %vm482
    %vm555 = vmand %vm543, %vm483
    %vm556 = vmand %vm544, %vm484
    %vm557 = vmand %vm545, %vm485
    %vm558 = vmand %vm546, %vm486
    %vm559 = vmand %vm547, %vm487
    %vm560 = vmand %vm548, %vm488
    %vm561 = vmand %vm549, %vm489
    %vm562 = vmand %vm550, %vm490
    %vm563 = vmand %vm551, %vm491
    %vm564 = vmand %vm552, %vm492
    %vm565 = vmand %vm553, %vm493
    %v566 = vsel %vm554, 1, 0
    %v567 = vsel %vm555, 1, 0
    %v568 = vsel %vm556, 1, 0
    %v569 = vsel %vm557, 1, 0
    %v570 = vsel %vm558, 1, 0
    %v571 = vsel %vm559, 1, 0
    %v572 = vsel %vm560, 1, 0
    %v573 = vsel %vm561, 1, 0
    %v574 = vsel %vm562, 1, 0
    %v575 = vsel %vm563, 1, 0
    %v576 = vsel %vm564, 1, 0
    %v577 = vsel %vm565, 1, 0
    %v578 = vcvt.s32.f32 %v566
    %v579 = vcvt.s32.f32 %v567
    %v580 = vcvt.s32.f32 %v568
    %v581 = vcvt.s32.f32 %v569
    %v582 = vcvt.s32.f32 %v570
    %v583 = vcvt.s32.f32 %v571
    %v584 = vcvt.s32.f32 %v572
    %v585 = vcvt.s32.f32 %v573
    %v586 = vcvt.s32.f32 %v574
    %v587 = vcvt.s32.f32 %v575
    %v588 = vcvt.s32.f32 %v576
    %v589 = vcvt.s32.f32 %v577
    %v590 = vmul.f32 %v578, %v232
    %v591 = vmul.f32 %v579, %v232
    %v592 = vmul.f32 %v580, %v232
    %v593 = vmul.f32 %v581, %v232
    %v594 = vmul.f32 %v582, %v232
    %v595 = vmul.f32 %v583, %v232
    %v596 = vmul.f32 %v584, %v232
    %v597 = vmul.f32 %v585, %v232
    %v598 = vmul.f32 %v586, %v232
    %v599 = vmul.f32 %v587, %v232
    %v600 = vmul.f32 %v588, %v232
    %v601 = vmul.f32 %v589, %v232
    %v602 = vpack.c.bf16 %v422, %v421
    %v603 = vpack.c.bf16 %v531, %v530
    %v604 = vpack.c.bf16 %v424, %v423
    %v605 = vpack.c.bf16 %v533, %v532
    %v606 = vpack.c.bf16 %v426, %v425
    %v607 = vpack.c.bf16 %v535, %v534
    %v608 = vpack.c.bf16 %v428, %v427
    %v609 = vpack.c.bf16 %v537, %v536
    %v610 = vpack.c.bf16 %v430, %v429
    %v611 = vpack.c.bf16 %v539, %v538
    %v612 = vpack.c.bf16 %v432, %v431
    %v613 = vpack.c.bf16 %v541, %v540
    %v614 = vpack.c.bf16 %v459, %v458
    %v615 = vpack.c.bf16 %v591, %v590
    %v616 = vpack.c.bf16 %v461, %v460
    %v617 = vpack.c.bf16 %v593, %v592
    %v618 = vpack.c.bf16 %v463, %v462
    %v619 = vpack.c.bf16 %v595, %v594
    %v620 = vpack.c.bf16 %v465, %v464
    %v621 = vpack.c.bf16 %v597, %v596
    %v622 = vpack.c.bf16 %v467, %v466
    %v623 = vpack.c.bf16 %v599, %v598
    %v624 = vpack.c.bf16 %v469, %v468
    %v625 = vpack.c.bf16 %v601, %v600
    %v658 = vunpack.c.l.b16 %v128
    %v659 = vunpack.c.l.b16 %v129
    %v660 = vunpack.c.l.b16 %v130
    %v661 = vunpack.c.l.b16 %v131
    %v662 = vunpack.c.l.b16 %v132
    %v663 = vunpack.c.l.b16 %v133
    %v664 = vunpack.c.l.b16 %v134
    %v665 = vunpack.c.l.b16 %v135
    %v666 = vunpack.c.l.b16 %v136
    %v667 = vunpack.c.l.b16 %v137
    %v668 = vunpack.c.l.b16 %v138
    %v669 = vunpack.c.l.b16 %v139
    %v670 = vunpack.c.l.b16 %v140
    %v671 = vunpack.c.l.b16 %v141
    %v672 = vunpack.c.l.b16 %v142
    %v673 = vunpack.c.l.b16 %v143
    %v674 = vunpack.c.l.b16 %v144
    %v675 = vunpack.c.l.b16 %v145
    %v676 = vunpack.c.l.b16 %v146
    %v677 = vunpack.c.l.b16 %v147
    %v678 = vunpack.c.l.b16 %v148
    %v679 = vunpack.c.l.b16 %v149
    %v680 = vunpack.c.l.b16 %v150
    %v681 = vunpack.c.l.b16 %v151
    %v682 = vunpack.c.l.b16 %v152
    %v683 = vunpack.c.l.b16 %v153
    %v684 = vunpack.c.l.b16 %v154
    %v685 = vunpack.c.l.b16 %v155
    %v686 = vunpack.c.l.b16 %v156
    %v687 = vunpack.c.l.b16 %v157
    %v688 = vunpack.c.l.b16 %v158
    %v689 = vunpack.c.l.b16 %v159
    %v690 = vpack.c.b16 %v659, %v658
    %v691 = vpack.c.b16 %v661, %v660
    %v692 = vpack.c.b16 %v663, %v662
    %v693 = vpack.c.b16 %v665, %v664
    %v694 = vpack.c.b16 %v667, %v666
    %v695 = vpack.c.b16 %v669, %v668
    %v696 = vpack.c.b16 %v671, %v670
    %v697 = vpack.c.b16 %v673, %v672
    %v698 = vpack.c.b16 %v675, %v674
    %v699 = vpack.c.b16 %v677, %v676
    %v700 = vpack.c.b16 %v679, %v678
    %v701 = vpack.c.b16 %v681, %v680
    %v702 = vpack.c.b16 %v683, %v682
    %v703 = vpack.c.b16 %v685, %v684
    %v704 = vpack.c.b16 %v687, %v686
    %v705 = vpack.c.b16 %v689, %v688
    %722 = vmatprep.subr.bf16.mxu0 0
    %723 = vmatpush1.bf16.msra.mxu0 %v690
    %724 = vmatprep.subr.bf16.mxu0 0
    %725 = vmatpush1.bf16.msra.mxu0 %v691
    %726 = vmatprep.subr.bf16.mxu0 0
    %727 = vmatpush1.bf16.msra.mxu0 %v692
    %728 = vmatprep.subr.bf16.mxu0 0
    %729 = vmatpush1.bf16.msra.mxu0 %v693
    %730 = vmatprep.subr.bf16.mxu0 0
    %731 = vmatpush1.bf16.msra.mxu0 %v694
    %732 = vmatprep.subr.bf16.mxu0 0
    %733 = vmatpush1.bf16.msra.mxu0 %v695
    %734 = vmatprep.subr.bf16.mxu0 0
    %735 = vmatpush1.bf16.msra.mxu0 %v696
    %736 = vmatprep.subr.bf16.mxu0 0
    %737 = vmatpush1.bf16.msra.mxu0 %v697
    %738 = vmatprep.subr.bf16.mxu0 0
    %739 = vmatpush1.bf16.msra.mxu0 %v698
    %740 = vmatprep.subr.bf16.mxu0 0
    %741 = vmatpush1.bf16.msra.mxu0 %v699
    %742 = vmatprep.subr.bf16.mxu0 0
    %743 = vmatpush1.bf16.msra.mxu0 %v700
    %744 = vmatprep.subr.bf16.mxu0 0
    %745 = vmatpush1.bf16.msra.mxu0 %v701
    %746 = vmatprep.subr.bf16.mxu0 0
    %747 = vmatpush1.bf16.msra.mxu0 %v702
    %748 = vmatprep.subr.bf16.mxu0 0
    %749 = vmatpush1.bf16.msra.mxu0 %v703
    %750 = vmatprep.subr.bf16.mxu0 0
    %751 = vmatpush1.bf16.msra.mxu0 %v704
    %752 = vmatprep.subr.bf16.mxu0 0
    %753 = vmatpush1.bf16.msra.mxu0 %v705
    %754 = vmatprep.mubr.bf16.mxu0 %v603
    %755 = vmatmul.mubr.bf16.gmra.mrb[0].mxu0 %v602
    %v756 = vpop.f32.mrb[0].mxu0
    %v757 = vadd.f32 0.0, %v756
    %v758 = vpop.f32.mrb[0].mxu0
    %v759 = vpop.f32.mrb[0].mxu0
    %v760 = vadd.f32 0.0, %v759
    %v761 = vpop.f32.mrb[0].mxu0
    %762 = vmatprep.mubr.bf16.mxu0 %v605
    %763 = vmatmul.mubr.bf16.gmra.mrb[0].mxu0 %v604
    %v764 = vpop.f32.mrb[0].mxu0
    %v765 = vadd.f32 0.0, %v764
    %v766 = vpop.f32.mrb[0].mxu0
    %v767 = vpop.f32.mrb[0].mxu0
    %v768 = vadd.f32 0.0, %v767
    %v769 = vpop.f32.mrb[0].mxu0
    %770 = vmatprep.mubr.bf16.mxu0 %v607
    %771 = vmatmul.mubr.bf16.gmra.mrb[0].mxu0 %v606
    %v772 = vpop.f32.mrb[0].mxu0
    %v773 = vadd.f32 0.0, %v772
    %v774 = vpop.f32.mrb[0].mxu0
    %v775 = vpop.f32.mrb[0].mxu0
    %v776 = vadd.f32 0.0, %v775
    %v777 = vpop.f32.mrb[0].mxu0
    %778 = vmatprep.mubr.bf16.mxu0 %v609
    %779 = vmatmul.mubr.bf16.gmra.mrb[0].mxu0 %v608
    %v780 = vpop.f32.mrb[0].mxu0
    %v781 = vadd.f32 0.0, %v780
    %v782 = vpop.f32.mrb[0].mxu0
    %v783 = vpop.f32.mrb[0].mxu0
    %v784 = vadd.f32 0.0, %v783
    %v785 = vpop.f32.mrb[0].mxu0
    %786 = vmatprep.mubr.bf16.mxu0 %v611
    %787 = vmatmul.mubr.bf16.gmra.mrb[0].mxu0 %v610
    %v788 = vpop.f32.mrb[0].mxu0
    %v789 = vadd.f32 0.0, %v788
    %v790 = vpop.f32.mrb[0].mxu0
    %v791 = vpop.f32.mrb[0].mxu0
    %v792 = vadd.f32 0.0, %v791
    %v793 = vpop.f32.mrb[0].mxu0
    %794 = vmatprep.mubr.bf16.mxu0 %v613
    %795 = vmatmul.mubr.bf16.gmra.mrb[0].mxu0 %v612
    %v796 = vpop.f32.mrb[0].mxu0
    %v797 = vadd.f32 0.0, %v796
    %v798 = vpop.f32.mrb[0].mxu0
    %v799 = vpop.f32.mrb[0].mxu0
    %v800 = vadd.f32 0.0, %v799
    %v801 = vpop.f32.mrb[0].mxu0
    %802 = vmatprep.mubr.bf16.mxu0 %v615
    %803 = vmatmul.mubr.bf16.gmra.mrb[0].mxu0 %v614
    %v804 = vpop.f32.mrb[0].mxu0
    %v805 = vadd.f32 0.0, %v804
    %v806 = vpop.f32.mrb[0].mxu0
    %v807 = vpop.f32.mrb[0].mxu0
    %v808 = vadd.f32 0.0, %v807
    %v809 = vpop.f32.mrb[0].mxu0
    %810 = vmatprep.mubr.bf16.mxu0 %v617
    %811 = vmatmul.mubr.bf16.gmra.mrb[0].mxu0 %v616
    %v812 = vpop.f32.mrb[0].mxu0
    %v813 = vadd.f32 0.0, %v812
    %v814 = vpop.f32.mrb[0].mxu0
    %v815 = vpop.f32.mrb[0].mxu0
    %v816 = vadd.f32 0.0, %v815
    %v817 = vpop.f32.mrb[0].mxu0
    %818 = vmatprep.mubr.bf16.mxu0 %v619
    %819 = vmatmul.mubr.bf16.gmra.mrb[0].mxu0 %v618
    %v820 = vpop.f32.mrb[0].mxu0
    %v821 = vadd.f32 0.0, %v820
    %v822 = vpop.f32.mrb[0].mxu0
    %v823 = vpop.f32.mrb[0].mxu0
    %v824 = vadd.f32 0.0, %v823
    %v825 = vpop.f32.mrb[0].mxu0
    %826 = vmatprep.mubr.bf16.mxu0 %v621
    %827 = vmatmul.mubr.bf16.gmra.mrb[0].mxu0 %v620
    %v828 = vpop.f32.mrb[0].mxu0
    %v829 = vadd.f32 0.0, %v828
    %v830 = vpop.f32.mrb[0].mxu0
    %v831 = vpop.f32.mrb[0].mxu0
    %v832 = vadd.f32 0.0, %v831
    %v833 = vpop.f32.mrb[0].mxu0
    %834 = vmatprep.mubr.bf16.mxu0 %v623
    %835 = vmatmul.mubr.bf16.gmra.mrb[0].mxu0 %v622
    %v836 = vpop.f32.mrb[0].mxu0
    %v837 = vadd.f32 0.0, %v836
    %v838 = vpop.f32.mrb[0].mxu0
    %v839 = vpop.f32.mrb[0].mxu0
    %v840 = vadd.f32 0.0, %v839
    %v841 = vpop.f32.mrb[0].mxu0
    %842 = vmatprep.mubr.bf16.mxu0 %v625
    %843 = vmatmul.mubr.bf16.gmra.mrb[0].mxu0 %v624
    %v844 = vpop.f32.mrb[0].mxu0
    %v845 = vadd.f32 0.0, %v844
    %v846 = vpop.f32.mrb[0].mxu0
    %v847 = vpop.f32.mrb[0].mxu0
    %v848 = vadd.f32 0.0, %v847
    %v849 = vpop.f32.mrb[0].mxu0
    %850 = vdwg.mxu0
    %v851 = vadd.f32 %v757, %v350
    %v852 = vadd.f32 %v760, %v353
    %v853 = vadd.f32 %v765, %v358
    %v854 = vadd.f32 %v768, %v361
    %v855 = vadd.f32 %v773, %v366
    %v856 = vadd.f32 %v776, %v369
    %v857 = vadd.f32 %v781, %v374
    %v858 = vadd.f32 %v784, %v377
    %v859 = vadd.f32 %v789, %v382
    %v860 = vadd.f32 %v792, %v385
    %v861 = vadd.f32 %v797, %v390
    %v862 = vadd.f32 %v800, %v393
    %v863 = vadd.f32 %v805, %v350
    %v864 = vadd.f32 %v808, %v353
    %v865 = vadd.f32 %v813, %v358
    %v866 = vadd.f32 %v816, %v361
    %v867 = vadd.f32 %v821, %v366
    %v868 = vadd.f32 %v824, %v369
    %v869 = vadd.f32 %v829, %v374
    %v870 = vadd.f32 %v832, %v377
    %v871 = vadd.f32 %v837, %v382
    %v872 = vadd.f32 %v840, %v385
    %v873 = vadd.f32 %v845, %v390
    %v874 = vadd.f32 %v848, %v393
    %v875 = vmul.f32 %v851, %v421
    %v876 = vmul.f32 %v852, %v422
    %v877 = vmul.f32 %v853, %v423
    %v878 = vmul.f32 %v854, %v424
    %v879 = vmul.f32 %v855, %v425
    %v880 = vmul.f32 %v856, %v426
    %v881 = vmul.f32 %v857, %v427
    %v882 = vmul.f32 %v858, %v428
    %v883 = vmul.f32 %v859, %v429
    %v884 = vmul.f32 %v860, %v430
    %v885 = vmul.f32 %v861, %v431
    %v886 = vmul.f32 %v862, %v432
    %v887 = vmul.f32 %v863, %v458
    %v888 = vmul.f32 %v864, %v459
    %v889 = vmul.f32 %v865, %v460
    %v890 = vmul.f32 %v866, %v461
    %v891 = vmul.f32 %v867, %v462
    %v892 = vmul.f32 %v868, %v463
    %v893 = vmul.f32 %v869, %v464
    %v894 = vmul.f32 %v870, %v465
    %v895 = vmul.f32 %v871, %v466
    %v896 = vmul.f32 %v872, %v467
    %v897 = vmul.f32 %v873, %v468
    %v898 = vmul.f32 %v874, %v469
    %v899 = vadd.f32 %v875, %v887
    %v900 = vadd.f32 %v876, %v888
    %v901 = vadd.f32 %v877, %v889
    %v902 = vadd.f32 %v878, %v890
    %v903 = vadd.f32 %v879, %v891
    %v904 = vadd.f32 %v880, %v892
    %v905 = vadd.f32 %v881, %v893
    %v906 = vadd.f32 %v882, %v894
    %v907 = vadd.f32 %v883, %v895
    %v908 = vadd.f32 %v884, %v896
    %v909 = vadd.f32 %v885, %v897
    %v910 = vadd.f32 %v886, %v898
    %911 = vrot.lane.b32.xlu0 %v899, 64
    %v912 = vpop.permute.xlu0 %911
    %913 = vrot.lane.b32.xlu0 %v900, 64
    %v914 = vpop.permute.xlu0 %913
    %915 = vrot.lane.b32.xlu0 %v901, 64
    %v916 = vpop.permute.xlu0 %915
    %917 = vrot.lane.b32.xlu0 %v902, 64
    %v918 = vpop.permute.xlu0 %917
    %919 = vrot.lane.b32.xlu0 %v903, 64
    %v920 = vpop.permute.xlu0 %919
    %921 = vrot.lane.b32.xlu0 %v904, 64
    %v922 = vpop.permute.xlu0 %921
    %923 = vrot.lane.b32.xlu0 %v905, 64
    %v924 = vpop.permute.xlu0 %923
    %925 = vrot.lane.b32.xlu0 %v906, 64
    %v926 = vpop.permute.xlu0 %925
    %927 = vrot.lane.b32.xlu0 %v907, 64
    %v928 = vpop.permute.xlu0 %927
    %929 = vrot.lane.b32.xlu0 %v908, 64
    %v930 = vpop.permute.xlu0 %929
    %931 = vrot.lane.b32.xlu0 %v909, 64
    %v932 = vpop.permute.xlu0 %931
    %933 = vrot.lane.b32.xlu0 %v910, 64
    %v934 = vpop.permute.xlu0 %933
    %v935 = vadd.f32 %v899, %v912
    %v936 = vadd.f32 %v900, %v914
    %v937 = vadd.f32 %v901, %v916
    %v938 = vadd.f32 %v902, %v918
    %v939 = vadd.f32 %v903, %v920
    %v940 = vadd.f32 %v904, %v922
    %v941 = vadd.f32 %v905, %v924
    %v942 = vadd.f32 %v906, %v926
    %v943 = vadd.f32 %v907, %v928
    %v944 = vadd.f32 %v908, %v930
    %v945 = vadd.f32 %v909, %v932
    %v946 = vadd.f32 %v910, %v934
    %v947 = vmul.f32 %v935, 0.5
    %v948 = vmul.f32 %v936, 0.5
    %v949 = vmul.f32 %v937, 0.5
    %v950 = vmul.f32 %v938, 0.5
    %v951 = vmul.f32 %v939, 0.5
    %v952 = vmul.f32 %v940, 0.5
    %v953 = vmul.f32 %v941, 0.5
    %v954 = vmul.f32 %v942, 0.5
    %v955 = vmul.f32 %v943, 0.5
    %v956 = vmul.f32 %v944, 0.5
    %v957 = vmul.f32 %v945, 0.5
    %v958 = vmul.f32 %v946, 0.5
    %v959 = vtanh.pop %v947
    %v960 = vtanh.pop %v948
    %v961 = vtanh.pop %v949
    %v962 = vtanh.pop %v950
    %v963 = vtanh.pop %v951
    %v964 = vtanh.pop %v952
    %v965 = vtanh.pop %v953
    %v966 = vtanh.pop %v954
    %v967 = vtanh.pop %v955
    %v968 = vtanh.pop %v956
    %v969 = vtanh.pop %v957
    %v970 = vtanh.pop %v958
    %v971 = vmul.f32 %v959, 0.5
    %v972 = vmul.f32 %v960, 0.5
    %v973 = vmul.f32 %v961, 0.5
    %v974 = vmul.f32 %v962, 0.5
    %v975 = vmul.f32 %v963, 0.5
    %v976 = vmul.f32 %v964, 0.5
    %v977 = vmul.f32 %v965, 0.5
    %v978 = vmul.f32 %v966, 0.5
    %v979 = vmul.f32 %v967, 0.5
    %v980 = vmul.f32 %v968, 0.5
    %v981 = vmul.f32 %v969, 0.5
    %v982 = vmul.f32 %v970, 0.5
    %v983 = vadd.f32 %v971, 0.5
    %v984 = vadd.f32 %v972, 0.5
    %v985 = vadd.f32 %v973, 0.5
    %v986 = vadd.f32 %v974, 0.5
    %v987 = vadd.f32 %v975, 0.5
    %v988 = vadd.f32 %v976, 0.5
    %v989 = vadd.f32 %v977, 0.5
    %v990 = vadd.f32 %v978, 0.5
    %v991 = vadd.f32 %v979, 0.5
    %v992 = vadd.f32 %v980, 0.5
    %v993 = vadd.f32 %v981, 0.5
    %v994 = vadd.f32 %v982, 0.5
    %v995 = vmul.f32 %v530, %v983
    %v996 = vmul.f32 %v531, %v984
    %v997 = vmul.f32 %v532, %v985
    %v998 = vmul.f32 %v533, %v986
    %v999 = vmul.f32 %v534, %v987
    %v1000 = vmul.f32 %v535, %v988
    %v1001 = vmul.f32 %v536, %v989
    %v1002 = vmul.f32 %v537, %v990
    %v1003 = vmul.f32 %v538, %v991
    %v1004 = vmul.f32 %v539, %v992
    %v1005 = vmul.f32 %v540, %v993
    %v1006 = vmul.f32 %v541, %v994
    %v1007 = vmul.f32 %v590, %v983
    %v1008 = vmul.f32 %v591, %v984
    %v1009 = vmul.f32 %v592, %v985
    %v1010 = vmul.f32 %v593, %v986
    %v1011 = vmul.f32 %v594, %v987
    %v1012 = vmul.f32 %v595, %v988
    %v1013 = vmul.f32 %v596, %v989
    %v1014 = vmul.f32 %v597, %v990
    %v1015 = vmul.f32 %v598, %v991
    %v1016 = vmul.f32 %v599, %v992
    %v1017 = vmul.f32 %v600, %v993
    %v1018 = vmul.f32 %v601, %v994
    %v1019 = vpack.c.bf16 %v996, %v995
    %v1020 = vpack.c.bf16 %v998, %v997
    %v1021 = vpack.c.bf16 %v1000, %v999
    %v1022 = vpack.c.bf16 %v1002, %v1001
    %v1023 = vpack.c.bf16 %v1004, %v1003
    %v1024 = vpack.c.bf16 %v1006, %v1005
    %v1025 = vpack.c.bf16 %v1008, %v1007
    %v1026 = vpack.c.bf16 %v1010, %v1009
    %v1027 = vpack.c.bf16 %v1012, %v1011
    %v1028 = vpack.c.bf16 %v1014, %v1013
    %v1029 = vpack.c.bf16 %v1016, %v1015
    %v1030 = vpack.c.bf16 %v1018, %v1017
    %v1047 = vunpack.c.l.b16 %v160
    %v1048 = vunpack.c.l.b16 %v161
    %v1049 = vunpack.c.l.b16 %v162
    %v1050 = vunpack.c.l.b16 %v163
    %v1051 = vunpack.c.l.b16 %v164
    %v1052 = vunpack.c.l.b16 %v165
    %v1053 = vunpack.c.l.b16 %v166
    %v1054 = vunpack.c.l.b16 %v167
    %v1055 = vunpack.c.l.b16 %v168
    %v1056 = vunpack.c.l.b16 %v169
    %v1057 = vunpack.c.l.b16 %v170
    %v1058 = vunpack.c.l.b16 %v171
    %v1059 = vunpack.c.l.b16 %v172
    %v1060 = vunpack.c.l.b16 %v173
    %v1061 = vunpack.c.l.b16 %v174
    %v1062 = vunpack.c.l.b16 %v175
    %v1063 = vpack.c.b16 %v1048, %v1047
    %v1064 = vpack.c.b16 %v1050, %v1049
    %v1065 = vpack.c.b16 %v1052, %v1051
    %v1066 = vpack.c.b16 %v1054, %v1053
    %v1067 = vpack.c.b16 %v1056, %v1055
    %v1068 = vpack.c.b16 %v1058, %v1057
    %v1069 = vpack.c.b16 %v1060, %v1059
    %v1070 = vpack.c.b16 %v1062, %v1061
    %1079 = vmatprep.subr.bf16.mxu0 0
    %1080 = vmatpush1.bf16.msra.mxu0 %v1063
    %1081 = vmatprep.subr.bf16.mxu0 0
    %1082 = vmatpush1.bf16.msra.mxu0 %v1064
    %1083 = vmatprep.subr.bf16.mxu0 0
    %1084 = vmatpush1.bf16.msra.mxu0 %v1065
    %1085 = vmatprep.subr.bf16.mxu0 0
    %1086 = vmatpush1.bf16.msra.mxu0 %v1066
    %1087 = vmatprep.subr.bf16.mxu0 0
    %1088 = vmatpush1.bf16.msra.mxu0 %v1067
    %1089 = vmatprep.subr.bf16.mxu0 0
    %1090 = vmatpush1.bf16.msra.mxu0 %v1068
    %1091 = vmatprep.subr.bf16.mxu0 0
    %1092 = vmatpush1.bf16.msra.mxu0 %v1069
    %1093 = vmatprep.subr.bf16.mxu0 0
    %1094 = vmatpush1.bf16.msra.mxu0 %v1070
    %1095 = vmatprep.subr.bf16.mxu0 0
    %1096 = vmatpush1.bf16.msra.mxu0 0
    %1097 = vmatprep.subr.bf16.mxu0 0
    %1098 = vmatpush1.bf16.msra.mxu0 0
    %1099 = vmatprep.subr.bf16.mxu0 0
    %1100 = vmatpush1.bf16.msra.mxu0 0
    %1101 = vmatprep.subr.bf16.mxu0 0
    %1102 = vmatpush1.bf16.msra.mxu0 0
    %1103 = vmatprep.subr.bf16.mxu0 0
    %1104 = vmatpush1.bf16.msra.mxu0 0
    %1105 = vmatprep.subr.bf16.mxu0 0
    %1106 = vmatpush1.bf16.msra.mxu0 0
    %1107 = vmatprep.subr.bf16.mxu0 0
    %1108 = vmatpush1.bf16.msra.mxu0 0
    %1109 = vmatprep.subr.bf16.mxu0 0
    %1110 = vmatpush1.bf16.msra.mxu0 0
    %1111 = vmatprep.mubr.bf16.mxu0 0
    %1112 = vmatmul.mubr.bf16.gmra.mrb[0].mxu0 %v1019
    %v1113 = vpop.f32.mrb[0].mxu0
    %v1114 = vadd.f32 0.0, %v1113
    %v1115 = vpop.f32.mrb[0].mxu0
    %v1116 = vpop.f32.mrb[0].mxu0
    %v1117 = vadd.f32 0.0, %v1116
    %v1118 = vpop.f32.mrb[0].mxu0
    %1119 = vmatprep.mubr.bf16.mxu0 0
    %1120 = vmatmul.mubr.bf16.gmra.mrb[0].mxu0 %v1020
    %v1121 = vpop.f32.mrb[0].mxu0
    %v1122 = vadd.f32 0.0, %v1121
    %v1123 = vpop.f32.mrb[0].mxu0
    %v1124 = vpop.f32.mrb[0].mxu0
    %v1125 = vadd.f32 0.0, %v1124
    %v1126 = vpop.f32.mrb[0].mxu0
    %1127 = vmatprep.mubr.bf16.mxu0 0
    %1128 = vmatmul.mubr.bf16.gmra.mrb[0].mxu0 %v1021
    %v1129 = vpop.f32.mrb[0].mxu0
    %v1130 = vadd.f32 0.0, %v1129
    %v1131 = vpop.f32.mrb[0].mxu0
    %v1132 = vpop.f32.mrb[0].mxu0
    %v1133 = vadd.f32 0.0, %v1132
    %v1134 = vpop.f32.mrb[0].mxu0
    %1135 = vmatprep.mubr.bf16.mxu0 0
    %1136 = vmatmul.mubr.bf16.gmra.mrb[0].mxu0 %v1022
    %v1137 = vpop.f32.mrb[0].mxu0
    %v1138 = vadd.f32 0.0, %v1137
    %v1139 = vpop.f32.mrb[0].mxu0
    %v1140 = vpop.f32.mrb[0].mxu0
    %v1141 = vadd.f32 0.0, %v1140
    %v1142 = vpop.f32.mrb[0].mxu0
    %1143 = vmatprep.mubr.bf16.mxu0 0
    %1144 = vmatmul.mubr.bf16.gmra.mrb[0].mxu0 %v1023
    %v1145 = vpop.f32.mrb[0].mxu0
    %v1146 = vadd.f32 0.0, %v1145
    %v1147 = vpop.f32.mrb[0].mxu0
    %v1148 = vpop.f32.mrb[0].mxu0
    %v1149 = vadd.f32 0.0, %v1148
    %v1150 = vpop.f32.mrb[0].mxu0
    %1151 = vmatprep.mubr.bf16.mxu0 0
    %1152 = vmatmul.mubr.bf16.gmra.mrb[0].mxu0 %v1024
    %v1153 = vpop.f32.mrb[0].mxu0
    %v1154 = vadd.f32 0.0, %v1153
    %v1155 = vpop.f32.mrb[0].mxu0
    %v1156 = vpop.f32.mrb[0].mxu0
    %v1157 = vadd.f32 0.0, %v1156
    %v1158 = vpop.f32.mrb[0].mxu0
    %1159 = vmatprep.mubr.bf16.mxu0 0
    %1160 = vmatmul.mubr.bf16.gmra.mrb[0].mxu0 %v1025
    %v1161 = vpop.f32.mrb[0].mxu0
    %v1162 = vadd.f32 0.0, %v1161
    %v1163 = vpop.f32.mrb[0].mxu0
    %v1164 = vpop.f32.mrb[0].mxu0
    %v1165 = vadd.f32 0.0, %v1164
    %v1166 = vpop.f32.mrb[0].mxu0
    %1167 = vmatprep.mubr.bf16.mxu0 0
    %1168 = vmatmul.mubr.bf16.gmra.mrb[0].mxu0 %v1026
    %v1169 = vpop.f32.mrb[0].mxu0
    %v1170 = vadd.f32 0.0, %v1169
    %v1171 = vpop.f32.mrb[0].mxu0
    %v1172 = vpop.f32.mrb[0].mxu0
    %v1173 = vadd.f32 0.0, %v1172
    %v1174 = vpop.f32.mrb[0].mxu0
    %1175 = vmatprep.mubr.bf16.mxu0 0
    %1176 = vmatmul.mubr.bf16.gmra.mrb[0].mxu0 %v1027
    %v1177 = vpop.f32.mrb[0].mxu0
    %v1178 = vadd.f32 0.0, %v1177
    %v1179 = vpop.f32.mrb[0].mxu0
    %v1180 = vpop.f32.mrb[0].mxu0
    %v1181 = vadd.f32 0.0, %v1180
    %v1182 = vpop.f32.mrb[0].mxu0
    %1183 = vmatprep.mubr.bf16.mxu0 0
    %1184 = vmatmul.mubr.bf16.gmra.mrb[0].mxu0 %v1028
    %v1185 = vpop.f32.mrb[0].mxu0
    %v1186 = vadd.f32 0.0, %v1185
    %v1187 = vpop.f32.mrb[0].mxu0
    %v1188 = vpop.f32.mrb[0].mxu0
    %v1189 = vadd.f32 0.0, %v1188
    %v1190 = vpop.f32.mrb[0].mxu0
    %1191 = vmatprep.mubr.bf16.mxu0 0
    %1192 = vmatmul.mubr.bf16.gmra.mrb[0].mxu0 %v1029
    %v1193 = vpop.f32.mrb[0].mxu0
    %v1194 = vadd.f32 0.0, %v1193
    %v1195 = vpop.f32.mrb[0].mxu0
    %v1196 = vpop.f32.mrb[0].mxu0
    %v1197 = vadd.f32 0.0, %v1196
    %v1198 = vpop.f32.mrb[0].mxu0
    %1199 = vmatprep.mubr.bf16.mxu0 0
    %1200 = vmatmul.mubr.bf16.gmra.mrb[0].mxu0 %v1030
    %v1201 = vpop.f32.mrb[0].mxu0
    %v1202 = vadd.f32 0.0, %v1201
    %v1203 = vpop.f32.mrb[0].mxu0
    %v1204 = vpop.f32.mrb[0].mxu0
    %v1205 = vadd.f32 0.0, %v1204
    %v1206 = vpop.f32.mrb[0].mxu0
    %1207 = vdwg.mxu0
    %v1208 = vadd.f32 %v875, %v350
    %v1209 = vadd.f32 %v876, %v353
    %v1210 = vadd.f32 %v877, %v358
    %v1211 = vadd.f32 %v878, %v361
    %v1212 = vadd.f32 %v879, %v366
    %v1213 = vadd.f32 %v880, %v369
    %v1214 = vadd.f32 %v881, %v374
    %v1215 = vadd.f32 %v882, %v377
    %v1216 = vadd.f32 %v883, %v382
    %v1217 = vadd.f32 %v884, %v385
    %v1218 = vadd.f32 %v885, %v390
    %v1219 = vadd.f32 %v886, %v393
    %v1220 = vadd.f32 %v887, %v350
    %v1221 = vadd.f32 %v888, %v353
    %v1222 = vadd.f32 %v889, %v358
    %v1223 = vadd.f32 %v890, %v361
    %v1224 = vadd.f32 %v891, %v366
    %v1225 = vadd.f32 %v892, %v369
    %v1226 = vadd.f32 %v893, %v374
    %v1227 = vadd.f32 %v894, %v377
    %v1228 = vadd.f32 %v895, %v382
    %v1229 = vadd.f32 %v896, %v385
    %v1230 = vadd.f32 %v897, %v390
    %v1231 = vadd.f32 %v898, %v393
    %v1232 = vadd.f32 %v1208, %v1114
    %v1233 = vadd.f32 %v1209, %v1117
    %v1234 = vadd.f32 %v1210, %v1122
    %v1235 = vadd.f32 %v1211, %v1125
    %v1236 = vadd.f32 %v1212, %v1130
    %v1237 = vadd.f32 %v1213, %v1133
    %v1238 = vadd.f32 %v1214, %v1138
    %v1239 = vadd.f32 %v1215, %v1141
    %v1240 = vadd.f32 %v1216, %v1146
    %v1241 = vadd.f32 %v1217, %v1149
    %v1242 = vadd.f32 %v1218, %v1154
    %v1243 = vadd.f32 %v1219, %v1157
    %v1244 = vadd.f32 %v1220, %v1162
    %v1245 = vadd.f32 %v1221, %v1165
    %v1246 = vadd.f32 %v1222, %v1170
    %v1247 = vadd.f32 %v1223, %v1173
    %v1248 = vadd.f32 %v1224, %v1178
    %v1249 = vadd.f32 %v1225, %v1181
    %v1250 = vadd.f32 %v1226, %v1186
    %v1251 = vadd.f32 %v1227, %v1189
    %v1252 = vadd.f32 %v1228, %v1194
    %v1253 = vadd.f32 %v1229, %v1197
    %v1254 = vadd.f32 %v1230, %v1202
    %v1255 = vadd.f32 %v1231, %v1205
    %v1256 = vmul.f32 %v1232, %v421
    %v1257 = vmul.f32 %v1233, %v422
    %v1258 = vmul.f32 %v1234, %v423
    %v1259 = vmul.f32 %v1235, %v424
    %v1260 = vmul.f32 %v1236, %v425
    %v1261 = vmul.f32 %v1237, %v426
    %v1262 = vmul.f32 %v1238, %v427
    %v1263 = vmul.f32 %v1239, %v428
    %v1264 = vmul.f32 %v1240, %v429
    %v1265 = vmul.f32 %v1241, %v430
    %v1266 = vmul.f32 %v1242, %v431
    %v1267 = vmul.f32 %v1243, %v432
    %v1268 = vmul.f32 %v1244, %v458
    %v1269 = vmul.f32 %v1245, %v459
    %v1270 = vmul.f32 %v1246, %v460
    %v1271 = vmul.f32 %v1247, %v461
    %v1272 = vmul.f32 %v1248, %v462
    %v1273 = vmul.f32 %v1249, %v463
    %v1274 = vmul.f32 %v1250, %v464
    %v1275 = vmul.f32 %v1251, %v465
    %v1276 = vmul.f32 %v1252, %v466
    %v1277 = vmul.f32 %v1253, %v467
    %v1278 = vmul.f32 %v1254, %v468
    %v1279 = vmul.f32 %v1255, %v469
    %v1280 = vadd.f32 %v1256, %v1268
    %v1281 = vadd.f32 %v1257, %v1269
    %v1282 = vadd.f32 %v1258, %v1270
    %v1283 = vadd.f32 %v1259, %v1271
    %v1284 = vadd.f32 %v1260, %v1272
    %v1285 = vadd.f32 %v1261, %v1273
    %v1286 = vadd.f32 %v1262, %v1274
    %v1287 = vadd.f32 %v1263, %v1275
    %v1288 = vadd.f32 %v1264, %v1276
    %v1289 = vadd.f32 %v1265, %v1277
    %v1290 = vadd.f32 %v1266, %v1278
    %v1291 = vadd.f32 %v1267, %v1279
    %1292 = vrot.lane.b32.xlu0 %v1280, 64
    %v1293 = vpop.permute.xlu0 %1292
    %1294 = vrot.lane.b32.xlu0 %v1281, 64
    %v1295 = vpop.permute.xlu0 %1294
    %1296 = vrot.lane.b32.xlu0 %v1282, 64
    %v1297 = vpop.permute.xlu0 %1296
    %1298 = vrot.lane.b32.xlu0 %v1283, 64
    %v1299 = vpop.permute.xlu0 %1298
    %1300 = vrot.lane.b32.xlu0 %v1284, 64
    %v1301 = vpop.permute.xlu0 %1300
    %1302 = vrot.lane.b32.xlu0 %v1285, 64
    %v1303 = vpop.permute.xlu0 %1302
    %1304 = vrot.lane.b32.xlu0 %v1286, 64
    %v1305 = vpop.permute.xlu0 %1304
    %1306 = vrot.lane.b32.xlu0 %v1287, 64
    %v1307 = vpop.permute.xlu0 %1306
    %1308 = vrot.lane.b32.xlu0 %v1288, 64
    %v1309 = vpop.permute.xlu0 %1308
    %1310 = vrot.lane.b32.xlu0 %v1289, 64
    %v1311 = vpop.permute.xlu0 %1310
    %1312 = vrot.lane.b32.xlu0 %v1290, 64
    %v1313 = vpop.permute.xlu0 %1312
    %1314 = vrot.lane.b32.xlu0 %v1291, 64
    %v1315 = vpop.permute.xlu0 %1314
    %v1316 = vadd.f32 %v1280, %v1293
    %v1317 = vadd.f32 %v1281, %v1295
    %v1318 = vadd.f32 %v1282, %v1297
    %v1319 = vadd.f32 %v1283, %v1299
    %v1320 = vadd.f32 %v1284, %v1301
    %v1321 = vadd.f32 %v1285, %v1303
    %v1322 = vadd.f32 %v1286, %v1305
    %v1323 = vadd.f32 %v1287, %v1307
    %v1324 = vadd.f32 %v1288, %v1309
    %v1325 = vadd.f32 %v1289, %v1311
    %v1326 = vadd.f32 %v1290, %v1313
    %v1327 = vadd.f32 %v1291, %v1315
    %v1328 = vmul.f32 %v1316, 0.5
    %v1329 = vmul.f32 %v1317, 0.5
    %v1330 = vmul.f32 %v1318, 0.5
    %v1331 = vmul.f32 %v1319, 0.5
    %v1332 = vmul.f32 %v1320, 0.5
    %v1333 = vmul.f32 %v1321, 0.5
    %v1334 = vmul.f32 %v1322, 0.5
    %v1335 = vmul.f32 %v1323, 0.5
    %v1336 = vmul.f32 %v1324, 0.5
    %v1337 = vmul.f32 %v1325, 0.5
    %v1338 = vmul.f32 %v1326, 0.5
    %v1339 = vmul.f32 %v1327, 0.5
    %v1340 = vtanh.pop %v1328
    %v1341 = vtanh.pop %v1329
    %v1342 = vtanh.pop %v1330
    %v1343 = vtanh.pop %v1331
    %v1344 = vtanh.pop %v1332
    %v1345 = vtanh.pop %v1333
    %v1346 = vtanh.pop %v1334
    %v1347 = vtanh.pop %v1335
    %v1348 = vtanh.pop %v1336
    %v1349 = vtanh.pop %v1337
    %v1350 = vtanh.pop %v1338
    %v1351 = vtanh.pop %v1339
    %v1352 = vmul.f32 %v530, %v1340
    %v1353 = vmul.f32 %v531, %v1341
    %v1354 = vmul.f32 %v532, %v1342
    %v1355 = vmul.f32 %v533, %v1343
    %v1356 = vmul.f32 %v534, %v1344
    %v1357 = vmul.f32 %v535, %v1345
    %v1358 = vmul.f32 %v536, %v1346
    %v1359 = vmul.f32 %v537, %v1347
    %v1360 = vmul.f32 %v538, %v1348
    %v1361 = vmul.f32 %v539, %v1349
    %v1362 = vmul.f32 %v540, %v1350
    %v1363 = vmul.f32 %v541, %v1351
    %v1364 = vmul.f32 %v590, %v1340
    %v1365 = vmul.f32 %v591, %v1341
    %v1366 = vmul.f32 %v592, %v1342
    %v1367 = vmul.f32 %v593, %v1343
    %v1368 = vmul.f32 %v594, %v1344
    %v1369 = vmul.f32 %v595, %v1345
    %v1370 = vmul.f32 %v596, %v1346
    %v1371 = vmul.f32 %v597, %v1347
    %v1372 = vmul.f32 %v598, %v1348
    %v1373 = vmul.f32 %v599, %v1349
    %v1374 = vmul.f32 %v600, %v1350
    %v1375 = vmul.f32 %v601, %v1351
    %v1376 = vpack.c.bf16 %v1353, %v1352
    %v1377 = vpack.c.bf16 %v1355, %v1354
    %v1378 = vpack.c.bf16 %v1357, %v1356
    %v1379 = vpack.c.bf16 %v1359, %v1358
    %v1380 = vpack.c.bf16 %v1361, %v1360
    %v1381 = vpack.c.bf16 %v1363, %v1362
    %v1382 = vpack.c.bf16 %v1365, %v1364
    %v1383 = vpack.c.bf16 %v1367, %v1366
    %v1384 = vpack.c.bf16 %v1369, %v1368
    %v1385 = vpack.c.bf16 %v1371, %v1370
    %v1386 = vpack.c.bf16 %v1373, %v1372
    %v1387 = vpack.c.bf16 %v1375, %v1374
    %1388 = vmatprep.subr.bf16.mxu0 0
    %1389 = vmatpush1.bf16.msra.mxu0 %v1063
    %1390 = vmatprep.subr.bf16.mxu0 0
    %1391 = vmatpush1.bf16.msra.mxu0 %v1064
    %1392 = vmatprep.subr.bf16.mxu0 0
    %1393 = vmatpush1.bf16.msra.mxu0 %v1065
    %1394 = vmatprep.subr.bf16.mxu0 0
    %1395 = vmatpush1.bf16.msra.mxu0 %v1066
    %1396 = vmatprep.subr.bf16.mxu0 0
    %1397 = vmatpush1.bf16.msra.mxu0 %v1067
    %1398 = vmatprep.subr.bf16.mxu0 0
    %1399 = vmatpush1.bf16.msra.mxu0 %v1068
    %1400 = vmatprep.subr.bf16.mxu0 0
    %1401 = vmatpush1.bf16.msra.mxu0 %v1069
    %1402 = vmatprep.subr.bf16.mxu0 0
    %1403 = vmatpush1.bf16.msra.mxu0 %v1070
    %1404 = vmatprep.subr.bf16.mxu0 0
    %1405 = vmatpush1.bf16.msra.mxu0 0
    %1406 = vmatprep.subr.bf16.mxu0 0
    %1407 = vmatpush1.bf16.msra.mxu0 0
    %1408 = vmatprep.subr.bf16.mxu0 0
    %1409 = vmatpush1.bf16.msra.mxu0 0
    %1410 = vmatprep.subr.bf16.mxu0 0
    %1411 = vmatpush1.bf16.msra.mxu0 0
    %1412 = vmatprep.subr.bf16.mxu0 0
    %1413 = vmatpush1.bf16.msra.mxu0 0
    %1414 = vmatprep.subr.bf16.mxu0 0
    %1415 = vmatpush1.bf16.msra.mxu0 0
    %1416 = vmatprep.subr.bf16.mxu0 0
    %1417 = vmatpush1.bf16.msra.mxu0 0
    %1418 = vmatprep.subr.bf16.mxu0 0
    %1419 = vmatpush1.bf16.msra.mxu0 0
    %1420 = vmatprep.mubr.bf16.mxu0 0
    %1421 = vmatmul.mubr.bf16.gmra.mrb[0].mxu0 %v1376
    %v1422 = vpop.f32.mrb[0].mxu0
    %v1423 = vadd.f32 0.0, %v1422
    %v1424 = vpop.f32.mrb[0].mxu0
    %v1425 = vpop.f32.mrb[0].mxu0
    %v1426 = vadd.f32 0.0, %v1425
    %v1427 = vpop.f32.mrb[0].mxu0
    %1428 = vmatprep.mubr.bf16.mxu0 0
    %1429 = vmatmul.mubr.bf16.gmra.mrb[0].mxu0 %v1377
    %v1430 = vpop.f32.mrb[0].mxu0
    %v1431 = vadd.f32 0.0, %v1430
    %v1432 = vpop.f32.mrb[0].mxu0
    %v1433 = vpop.f32.mrb[0].mxu0
    %v1434 = vadd.f32 0.0, %v1433
    %v1435 = vpop.f32.mrb[0].mxu0
    %1436 = vmatprep.mubr.bf16.mxu0 0
    %1437 = vmatmul.mubr.bf16.gmra.mrb[0].mxu0 %v1378
    %v1438 = vpop.f32.mrb[0].mxu0
    %v1439 = vadd.f32 0.0, %v1438
    %v1440 = vpop.f32.mrb[0].mxu0
    %v1441 = vpop.f32.mrb[0].mxu0
    %v1442 = vadd.f32 0.0, %v1441
    %v1443 = vpop.f32.mrb[0].mxu0
    %1444 = vmatprep.mubr.bf16.mxu0 0
    %1445 = vmatmul.mubr.bf16.gmra.mrb[0].mxu0 %v1379
    %v1446 = vpop.f32.mrb[0].mxu0
    %v1447 = vadd.f32 0.0, %v1446
    %v1448 = vpop.f32.mrb[0].mxu0
    %v1449 = vpop.f32.mrb[0].mxu0
    %v1450 = vadd.f32 0.0, %v1449
    %v1451 = vpop.f32.mrb[0].mxu0
    %1452 = vmatprep.mubr.bf16.mxu0 0
    %1453 = vmatmul.mubr.bf16.gmra.mrb[0].mxu0 %v1380
    %v1454 = vpop.f32.mrb[0].mxu0
    %v1455 = vadd.f32 0.0, %v1454
    %v1456 = vpop.f32.mrb[0].mxu0
    %v1457 = vpop.f32.mrb[0].mxu0
    %v1458 = vadd.f32 0.0, %v1457
    %v1459 = vpop.f32.mrb[0].mxu0
    %1460 = vmatprep.mubr.bf16.mxu0 0
    %1461 = vmatmul.mubr.bf16.gmra.mrb[0].mxu0 %v1381
    %v1462 = vpop.f32.mrb[0].mxu0
    %v1463 = vadd.f32 0.0, %v1462
    %v1464 = vpop.f32.mrb[0].mxu0
    %v1465 = vpop.f32.mrb[0].mxu0
    %v1466 = vadd.f32 0.0, %v1465
    %v1467 = vpop.f32.mrb[0].mxu0
    %1468 = vmatprep.mubr.bf16.mxu0 0
    %1469 = vmatmul.mubr.bf16.gmra.mrb[0].mxu0 %v1382
    %v1470 = vpop.f32.mrb[0].mxu0
    %v1471 = vadd.f32 0.0, %v1470
    %v1472 = vpop.f32.mrb[0].mxu0
    %v1473 = vpop.f32.mrb[0].mxu0
    %v1474 = vadd.f32 0.0, %v1473
    %v1475 = vpop.f32.mrb[0].mxu0
    %1476 = vmatprep.mubr.bf16.mxu0 0
    %1477 = vmatmul.mubr.bf16.gmra.mrb[0].mxu0 %v1383
    %v1478 = vpop.f32.mrb[0].mxu0
    %v1479 = vadd.f32 0.0, %v1478
    %v1480 = vpop.f32.mrb[0].mxu0
    %v1481 = vpop.f32.mrb[0].mxu0
    %v1482 = vadd.f32 0.0, %v1481
    %v1483 = vpop.f32.mrb[0].mxu0
    %1484 = vmatprep.mubr.bf16.mxu0 0
    %1485 = vmatmul.mubr.bf16.gmra.mrb[0].mxu0 %v1384
    %v1486 = vpop.f32.mrb[0].mxu0
    %v1487 = vadd.f32 0.0, %v1486
    %v1488 = vpop.f32.mrb[0].mxu0
    %v1489 = vpop.f32.mrb[0].mxu0
    %v1490 = vadd.f32 0.0, %v1489
    %v1491 = vpop.f32.mrb[0].mxu0
    %1492 = vmatprep.mubr.bf16.mxu0 0
    %1493 = vmatmul.mubr.bf16.gmra.mrb[0].mxu0 %v1385
    %v1494 = vpop.f32.mrb[0].mxu0
    %v1495 = vadd.f32 0.0, %v1494
    %v1496 = vpop.f32.mrb[0].mxu0
    %v1497 = vpop.f32.mrb[0].mxu0
    %v1498 = vadd.f32 0.0, %v1497
    %v1499 = vpop.f32.mrb[0].mxu0
    %1500 = vmatprep.mubr.bf16.mxu0 0
    %1501 = vmatmul.mubr.bf16.gmra.mrb[0].mxu0 %v1386
    %v1502 = vpop.f32.mrb[0].mxu0
    %v1503 = vadd.f32 0.0, %v1502
    %v1504 = vpop.f32.mrb[0].mxu0
    %v1505 = vpop.f32.mrb[0].mxu0
    %v1506 = vadd.f32 0.0, %v1505
    %v1507 = vpop.f32.mrb[0].mxu0
    %1508 = vmatprep.mubr.bf16.mxu0 0
    %1509 = vmatmul.mubr.bf16.gmra.mrb[0].mxu0 %v1387
    %v1510 = vpop.f32.mrb[0].mxu0
    %v1511 = vadd.f32 0.0, %v1510
    %v1512 = vpop.f32.mrb[0].mxu0
    %v1513 = vpop.f32.mrb[0].mxu0
    %v1514 = vadd.f32 0.0, %v1513
    %v1515 = vpop.f32.mrb[0].mxu0
    %1516 = vdwg.mxu0
    %v1517 = vadd.f32 %v1256, %v350
    %v1518 = vadd.f32 %v1257, %v353
    %v1519 = vadd.f32 %v1258, %v358
    %v1520 = vadd.f32 %v1259, %v361
    %v1521 = vadd.f32 %v1260, %v366
    %v1522 = vadd.f32 %v1261, %v369
    %v1523 = vadd.f32 %v1262, %v374
    %v1524 = vadd.f32 %v1263, %v377
    %v1525 = vadd.f32 %v1264, %v382
    %v1526 = vadd.f32 %v1265, %v385
    %v1527 = vadd.f32 %v1266, %v390
    %v1528 = vadd.f32 %v1267, %v393
    %v1529 = vadd.f32 %v1268, %v350
    %v1530 = vadd.f32 %v1269, %v353
    %v1531 = vadd.f32 %v1270, %v358
    %v1532 = vadd.f32 %v1271, %v361
    %v1533 = vadd.f32 %v1272, %v366
    %v1534 = vadd.f32 %v1273, %v369
    %v1535 = vadd.f32 %v1274, %v374
    %v1536 = vadd.f32 %v1275, %v377
    %v1537 = vadd.f32 %v1276, %v382
    %v1538 = vadd.f32 %v1277, %v385
    %v1539 = vadd.f32 %v1278, %v390
    %v1540 = vadd.f32 %v1279, %v393
    %v1541 = vadd.f32 %v1517, %v1423
    %v1542 = vadd.f32 %v1518, %v1426
    %v1543 = vadd.f32 %v1519, %v1431
    %v1544 = vadd.f32 %v1520, %v1434
    %v1545 = vadd.f32 %v1521, %v1439
    %v1546 = vadd.f32 %v1522, %v1442
    %v1547 = vadd.f32 %v1523, %v1447
    %v1548 = vadd.f32 %v1524, %v1450
    %v1549 = vadd.f32 %v1525, %v1455
    %v1550 = vadd.f32 %v1526, %v1458
    %v1551 = vadd.f32 %v1527, %v1463
    %v1552 = vadd.f32 %v1528, %v1466
    %v1553 = vadd.f32 %v1529, %v1471
    %v1554 = vadd.f32 %v1530, %v1474
    %v1555 = vadd.f32 %v1531, %v1479
    %v1556 = vadd.f32 %v1532, %v1482
    %v1557 = vadd.f32 %v1533, %v1487
    %v1558 = vadd.f32 %v1534, %v1490
    %v1559 = vadd.f32 %v1535, %v1495
    %v1560 = vadd.f32 %v1536, %v1498
    %v1561 = vadd.f32 %v1537, %v1503
    %v1562 = vadd.f32 %v1538, %v1506
    %v1563 = vadd.f32 %v1539, %v1511
    %v1564 = vadd.f32 %v1540, %v1514
    %v1565 = vmul.f32 %v1541, %v421
    %v1566 = vmul.f32 %v1542, %v422
    %v1567 = vmul.f32 %v1543, %v423
    %v1568 = vmul.f32 %v1544, %v424
    %v1569 = vmul.f32 %v1545, %v425
    %v1570 = vmul.f32 %v1546, %v426
    %v1571 = vmul.f32 %v1547, %v427
    %v1572 = vmul.f32 %v1548, %v428
    %v1573 = vmul.f32 %v1549, %v429
    %v1574 = vmul.f32 %v1550, %v430
    %v1575 = vmul.f32 %v1551, %v431
    %v1576 = vmul.f32 %v1552, %v432
    %v1577 = vmul.f32 %v1553, %v458
    %v1578 = vmul.f32 %v1554, %v459
    %v1579 = vmul.f32 %v1555, %v460
    %v1580 = vmul.f32 %v1556, %v461
    %v1581 = vmul.f32 %v1557, %v462
    %v1582 = vmul.f32 %v1558, %v463
    %v1583 = vmul.f32 %v1559, %v464
    %v1584 = vmul.f32 %v1560, %v465
    %v1585 = vmul.f32 %v1561, %v466
    %v1586 = vmul.f32 %v1562, %v467
    %v1587 = vmul.f32 %v1563, %v468
    %v1588 = vmul.f32 %v1564, %v469
    %v1589 = vadd.f32 %v1565, %v1577
    %v1590 = vadd.f32 %v1566, %v1578
    %v1591 = vadd.f32 %v1567, %v1579
    %v1592 = vadd.f32 %v1568, %v1580
    %v1593 = vadd.f32 %v1569, %v1581
    %v1594 = vadd.f32 %v1570, %v1582
    %v1595 = vadd.f32 %v1571, %v1583
    %v1596 = vadd.f32 %v1572, %v1584
    %v1597 = vadd.f32 %v1573, %v1585
    %v1598 = vadd.f32 %v1574, %v1586
    %v1599 = vadd.f32 %v1575, %v1587
    %v1600 = vadd.f32 %v1576, %v1588
    %1601 = vrot.lane.b32.xlu0 %v1589, 64
    %v1602 = vpop.permute.xlu0 %1601
    %1603 = vrot.lane.b32.xlu0 %v1590, 64
    %v1604 = vpop.permute.xlu0 %1603
    %1605 = vrot.lane.b32.xlu0 %v1591, 64
    %v1606 = vpop.permute.xlu0 %1605
    %1607 = vrot.lane.b32.xlu0 %v1592, 64
    %v1608 = vpop.permute.xlu0 %1607
    %1609 = vrot.lane.b32.xlu0 %v1593, 64
    %v1610 = vpop.permute.xlu0 %1609
    %1611 = vrot.lane.b32.xlu0 %v1594, 64
    %v1612 = vpop.permute.xlu0 %1611
    %1613 = vrot.lane.b32.xlu0 %v1595, 64
    %v1614 = vpop.permute.xlu0 %1613
    %1615 = vrot.lane.b32.xlu0 %v1596, 64
    %v1616 = vpop.permute.xlu0 %1615
    %1617 = vrot.lane.b32.xlu0 %v1597, 64
    %v1618 = vpop.permute.xlu0 %1617
    %1619 = vrot.lane.b32.xlu0 %v1598, 64
    %v1620 = vpop.permute.xlu0 %1619
    %1621 = vrot.lane.b32.xlu0 %v1599, 64
    %v1622 = vpop.permute.xlu0 %1621
    %1623 = vrot.lane.b32.xlu0 %v1600, 64
    %v1624 = vpop.permute.xlu0 %1623
    %v1625 = vadd.f32 %v1589, %v1602
    %v1626 = vadd.f32 %v1590, %v1604
    %v1627 = vadd.f32 %v1591, %v1606
    %v1628 = vadd.f32 %v1592, %v1608
    %v1629 = vadd.f32 %v1593, %v1610
    %v1630 = vadd.f32 %v1594, %v1612
    %v1631 = vadd.f32 %v1595, %v1614
    %v1632 = vadd.f32 %v1596, %v1616
    %v1633 = vadd.f32 %v1597, %v1618
    %v1634 = vadd.f32 %v1598, %v1620
    %v1635 = vadd.f32 %v1599, %v1622
    %v1636 = vadd.f32 %v1600, %v1624
    %v1637 = vmul.f32 %v1625, 0.5
    %v1638 = vmul.f32 %v1626, 0.5
    %v1639 = vmul.f32 %v1627, 0.5
    %v1640 = vmul.f32 %v1628, 0.5
    %v1641 = vmul.f32 %v1629, 0.5
    %v1642 = vmul.f32 %v1630, 0.5
    %v1643 = vmul.f32 %v1631, 0.5
    %v1644 = vmul.f32 %v1632, 0.5
    %v1645 = vmul.f32 %v1633, 0.5
    %v1646 = vmul.f32 %v1634, 0.5
    %v1647 = vmul.f32 %v1635, 0.5
    %v1648 = vmul.f32 %v1636, 0.5
    %v1649 = vtanh.pop %v1637
    %v1650 = vtanh.pop %v1638
    %v1651 = vtanh.pop %v1639
    %v1652 = vtanh.pop %v1640
    %v1653 = vtanh.pop %v1641
    %v1654 = vtanh.pop %v1642
    %v1655 = vtanh.pop %v1643
    %v1656 = vtanh.pop %v1644
    %v1657 = vtanh.pop %v1645
    %v1658 = vtanh.pop %v1646
    %v1659 = vtanh.pop %v1647
    %v1660 = vtanh.pop %v1648
    %v1661 = vpack.c.bf16 %v1650, %v1649
    %v1662 = vpack.c.bf16 %v1652, %v1651
    %v1663 = vpack.c.bf16 %v1654, %v1653
    %v1664 = vpack.c.bf16 %v1656, %v1655
    %v1665 = vpack.c.bf16 %v1658, %v1657
    %v1666 = vpack.c.bf16 %v1660, %v1659
    %v1683 = vunpack.c.l.b16 %v192
    %v1684 = vunpack.c.l.b16 %v193
    %v1685 = vunpack.c.l.b16 %v194
    %v1686 = vunpack.c.l.b16 %v195
    %v1687 = vunpack.c.l.b16 %v196
    %v1688 = vunpack.c.l.b16 %v197
    %v1689 = vunpack.c.l.b16 %v198
    %v1690 = vunpack.c.l.b16 %v199
    %v1691 = vunpack.c.l.b16 %v200
    %v1692 = vunpack.c.l.b16 %v201
    %v1693 = vunpack.c.l.b16 %v202
    %v1694 = vunpack.c.l.b16 %v203
    %v1695 = vunpack.c.l.b16 %v204
    %v1696 = vunpack.c.l.b16 %v205
    %v1697 = vunpack.c.l.b16 %v206
    %v1698 = vunpack.c.l.b16 %v207
    %v1699 = vpack.c.b16 %v1684, %v1683
    %v1700 = vpack.c.b16 %v1686, %v1685
    %v1701 = vpack.c.b16 %v1688, %v1687
    %v1702 = vpack.c.b16 %v1690, %v1689
    %v1703 = vpack.c.b16 %v1692, %v1691
    %v1704 = vpack.c.b16 %v1694, %v1693
    %v1705 = vpack.c.b16 %v1696, %v1695
    %v1706 = vpack.c.b16 %v1698, %v1697
    %1715 = vmatprep.subr.bf16.mxu0 0
    %1716 = vmatpush1.bf16.msra.mxu0 %v1699
    %1717 = vmatprep.subr.bf16.mxu0 0
    %1718 = vmatpush1.bf16.msra.mxu0 %v1700
    %1719 = vmatprep.subr.bf16.mxu0 0
    %1720 = vmatpush1.bf16.msra.mxu0 %v1701
    %1721 = vmatprep.subr.bf16.mxu0 0
    %1722 = vmatpush1.bf16.msra.mxu0 %v1702
    %1723 = vmatprep.subr.bf16.mxu0 0
    %1724 = vmatpush1.bf16.msra.mxu0 %v1703
    %1725 = vmatprep.subr.bf16.mxu0 0
    %1726 = vmatpush1.bf16.msra.mxu0 %v1704
    %1727 = vmatprep.subr.bf16.mxu0 0
    %1728 = vmatpush1.bf16.msra.mxu0 %v1705
    %1729 = vmatprep.subr.bf16.mxu0 0
    %1730 = vmatpush1.bf16.msra.mxu0 %v1706
    %1731 = vmatprep.subr.bf16.mxu0 0
    %1732 = vmatpush1.bf16.msra.mxu0 0
    %1733 = vmatprep.subr.bf16.mxu0 0
    %1734 = vmatpush1.bf16.msra.mxu0 0
    %1735 = vmatprep.subr.bf16.mxu0 0
    %1736 = vmatpush1.bf16.msra.mxu0 0
    %1737 = vmatprep.subr.bf16.mxu0 0
    %1738 = vmatpush1.bf16.msra.mxu0 0
    %1739 = vmatprep.subr.bf16.mxu0 0
    %1740 = vmatpush1.bf16.msra.mxu0 0
    %1741 = vmatprep.subr.bf16.mxu0 0
    %1742 = vmatpush1.bf16.msra.mxu0 0
    %1743 = vmatprep.subr.bf16.mxu0 0
    %1744 = vmatpush1.bf16.msra.mxu0 0
    %1745 = vmatprep.subr.bf16.mxu0 0
    %1746 = vmatpush1.bf16.msra.mxu0 0
    %1747 = vmatprep.mubr.bf16.mxu0 0
    %1748 = vmatmul.mubr.bf16.gmra.mrb[0].mxu0 %v1661
    %v1749 = vpop.f32.mrb[0].mxu0
    %v1750 = vadd.f32 0.0, %v1749
    %v1751 = vpop.f32.mrb[0].mxu0
    %v1752 = vpop.f32.mrb[0].mxu0
    %v1753 = vadd.f32 0.0, %v1752
    %v1754 = vpop.f32.mrb[0].mxu0
    %1755 = vmatprep.mubr.bf16.mxu0 0
    %1756 = vmatmul.mubr.bf16.gmra.mrb[0].mxu0 %v1662
    %v1757 = vpop.f32.mrb[0].mxu0
    %v1758 = vadd.f32 0.0, %v1757
    %v1759 = vpop.f32.mrb[0].mxu0
    %v1760 = vpop.f32.mrb[0].mxu0
    %v1761 = vadd.f32 0.0, %v1760
    %v1762 = vpop.f32.mrb[0].mxu0
    %1763 = vmatprep.mubr.bf16.mxu0 0
    %1764 = vmatmul.mubr.bf16.gmra.mrb[0].mxu0 %v1663
    %v1765 = vpop.f32.mrb[0].mxu0
    %v1766 = vadd.f32 0.0, %v1765
    %v1767 = vpop.f32.mrb[0].mxu0
    %v1768 = vpop.f32.mrb[0].mxu0
    %v1769 = vadd.f32 0.0, %v1768
    %v1770 = vpop.f32.mrb[0].mxu0
    %1771 = vmatprep.mubr.bf16.mxu0 0
    %1772 = vmatmul.mubr.bf16.gmra.mrb[0].mxu0 %v1664
    %v1773 = vpop.f32.mrb[0].mxu0
    %v1774 = vadd.f32 0.0, %v1773
    %v1775 = vpop.f32.mrb[0].mxu0
    %v1776 = vpop.f32.mrb[0].mxu0
    %v1777 = vadd.f32 0.0, %v1776
    %v1778 = vpop.f32.mrb[0].mxu0
    %1779 = vmatprep.mubr.bf16.mxu0 0
    %1780 = vmatmul.mubr.bf16.gmra.mrb[0].mxu0 %v1665
    %v1781 = vpop.f32.mrb[0].mxu0
    %v1782 = vadd.f32 0.0, %v1781
    %v1783 = vpop.f32.mrb[0].mxu0
    %v1784 = vpop.f32.mrb[0].mxu0
    %v1785 = vadd.f32 0.0, %v1784
    %v1786 = vpop.f32.mrb[0].mxu0
    %1787 = vmatprep.mubr.bf16.mxu0 0
    %1788 = vmatmul.mubr.bf16.gmra.mrb[0].mxu0 %v1666
    %v1789 = vpop.f32.mrb[0].mxu0
    %v1790 = vadd.f32 0.0, %v1789
    %v1791 = vpop.f32.mrb[0].mxu0
    %v1792 = vpop.f32.mrb[0].mxu0
    %v1793 = vadd.f32 0.0, %v1792
    %v1794 = vpop.f32.mrb[0].mxu0
    %1795 = vdwg.mxu0
    %vm1796 = vcmp.ge.f32.partialorder %v1750, 0.0
    %vm1797 = vcmp.ge.f32.partialorder %v1753, 0.0
    %vm1798 = vcmp.ge.f32.partialorder %v1758, 0.0
    %vm1799 = vcmp.ge.f32.partialorder %v1761, 0.0
    %vm1800 = vcmp.ge.f32.partialorder %v1766, 0.0
    %vm1801 = vcmp.ge.f32.partialorder %v1769, 0.0
    %vm1802 = vcmp.ge.f32.partialorder %v1774, 0.0
    %vm1803 = vcmp.ge.f32.partialorder %v1777, 0.0
    %vm1804 = vcmp.ge.f32.partialorder %v1782, 0.0
    %vm1805 = vcmp.ge.f32.partialorder %v1785, 0.0
    %vm1806 = vcmp.ge.f32.partialorder %v1790, 0.0
    %vm1807 = vcmp.ge.f32.partialorder %v1793, 0.0
    %v1808 = vmul.f32 %v1750, 0.2
    %v1809 = vmul.f32 %v1753, 0.2
    %v1810 = vmul.f32 %v1758, 0.2
    %v1811 = vmul.f32 %v1761, 0.2
    %v1812 = vmul.f32 %v1766, 0.2
    %v1813 = vmul.f32 %v1769, 0.2
    %v1814 = vmul.f32 %v1774, 0.2
    %v1815 = vmul.f32 %v1777, 0.2
    %v1816 = vmul.f32 %v1782, 0.2
    %v1817 = vmul.f32 %v1785, 0.2
    %v1818 = vmul.f32 %v1790, 0.2
    %v1819 = vmul.f32 %v1793, 0.2
    %v1820 = vsel %vm1796, %v1750, %v1808
    %v1821 = vsel %vm1797, %v1753, %v1809
    %v1822 = vsel %vm1798, %v1758, %v1810
    %v1823 = vsel %vm1799, %v1761, %v1811
    %v1824 = vsel %vm1800, %v1766, %v1812
    %v1825 = vsel %vm1801, %v1769, %v1813
    %v1826 = vsel %vm1802, %v1774, %v1814
    %v1827 = vsel %vm1803, %v1777, %v1815
    %v1828 = vsel %vm1804, %v1782, %v1816
    %v1829 = vsel %vm1805, %v1785, %v1817
    %v1830 = vsel %vm1806, %v1790, %v1818
    %v1831 = vsel %vm1807, %v1793, %v1819
    %v1832 = vpack.c.bf16 %v1821, %v1820
    %v1833 = vpack.c.bf16 %v1823, %v1822
    %v1834 = vpack.c.bf16 %v1825, %v1824
    %v1835 = vpack.c.bf16 %v1827, %v1826
    %v1836 = vpack.c.bf16 %v1829, %v1828
    %v1837 = vpack.c.bf16 %v1831, %v1830
    %v1839 = vlaneseq
    %v1840 = vshrl.u32 %v1839, 7
    %v1841 = vsub.s32 0, %v1840
    %v1842 = vrot.slane %v224, %v1841
    %v1860 = vunpack.c.l.b16 %v208
    %v1861 = vunpack.c.l.b16 %v209
    %v1862 = vunpack.c.l.b16 %v210
    %v1863 = vunpack.c.l.b16 %v211
    %v1864 = vunpack.c.l.b16 %v212
    %v1865 = vunpack.c.l.b16 %v213
    %v1866 = vunpack.c.l.b16 %v214
    %v1867 = vunpack.c.l.b16 %v215
    %v1868 = vunpack.c.l.b16 %v216
    %v1869 = vunpack.c.l.b16 %v217
    %v1870 = vunpack.c.l.b16 %v218
    %v1871 = vunpack.c.l.b16 %v219
    %v1872 = vunpack.c.l.b16 %v220
    %v1873 = vunpack.c.l.b16 %v221
    %v1874 = vunpack.c.l.b16 %v222
    %v1875 = vunpack.c.l.b16 %v223
    %v1876 = vpack.c.b16 %v1861, %v1860
    %v1877 = vpack.c.b16 %v1863, %v1862
    %v1878 = vpack.c.b16 %v1865, %v1864
    %v1879 = vpack.c.b16 %v1867, %v1866
    %v1880 = vpack.c.b16 %v1869, %v1868
    %v1881 = vpack.c.b16 %v1871, %v1870
    %v1882 = vpack.c.b16 %v1873, %v1872
    %v1883 = vpack.c.b16 %v1875, %v1874
    %1892 = vmatprep.subr.bf16.mxu0 0
    %1893 = vmatpush1.bf16.msra.mxu0 %v1876
    %1894 = vmatprep.subr.bf16.mxu0 0
    %1895 = vmatpush1.bf16.msra.mxu0 %v1877
    %1896 = vmatprep.subr.bf16.mxu0 0
    %1897 = vmatpush1.bf16.msra.mxu0 %v1878
    %1898 = vmatprep.subr.bf16.mxu0 0
    %1899 = vmatpush1.bf16.msra.mxu0 %v1879
    %1900 = vmatprep.subr.bf16.mxu0 0
    %1901 = vmatpush1.bf16.msra.mxu0 %v1880
    %1902 = vmatprep.subr.bf16.mxu0 0
    %1903 = vmatpush1.bf16.msra.mxu0 %v1881
    %1904 = vmatprep.subr.bf16.mxu0 0
    %1905 = vmatpush1.bf16.msra.mxu0 %v1882
    %1906 = vmatprep.subr.bf16.mxu0 0
    %1907 = vmatpush1.bf16.msra.mxu0 %v1883
    %1908 = vmatprep.subr.bf16.mxu0 0
    %1909 = vmatpush1.bf16.msra.mxu0 0
    %1910 = vmatprep.subr.bf16.mxu0 0
    %1911 = vmatpush1.bf16.msra.mxu0 0
    %1912 = vmatprep.subr.bf16.mxu0 0
    %1913 = vmatpush1.bf16.msra.mxu0 0
    %1914 = vmatprep.subr.bf16.mxu0 0
    %1915 = vmatpush1.bf16.msra.mxu0 0
    %1916 = vmatprep.subr.bf16.mxu0 0
    %1917 = vmatpush1.bf16.msra.mxu0 0
    %1918 = vmatprep.subr.bf16.mxu0 0
    %1919 = vmatpush1.bf16.msra.mxu0 0
    %1920 = vmatprep.subr.bf16.mxu0 0
    %1921 = vmatpush1.bf16.msra.mxu0 0
    %1922 = vmatprep.subr.bf16.mxu0 0
    %1923 = vmatpush1.bf16.msra.mxu0 0
    %1924 = vmatprep.mubr.bf16.mxu0 0
    %1925 = vmatmul.mubr.bf16.gmra.mrb[0].mxu0 %v1832
    %v1926 = vpop.f32.mrb[0].mxu0
    %v1927 = vadd.f32 %v1842, %v1926
    %v1928 = vpop.f32.mrb[0].mxu0
    %v1929 = vpop.f32.mrb[0].mxu0
    %v1930 = vadd.f32 %v1842, %v1929
    %v1931 = vpop.f32.mrb[0].mxu0
    %1932 = vmatprep.mubr.bf16.mxu0 0
    %1933 = vmatmul.mubr.bf16.gmra.mrb[0].mxu0 %v1833
    %v1934 = vpop.f32.mrb[0].mxu0
    %v1935 = vadd.f32 %v1842, %v1934
    %v1936 = vpop.f32.mrb[0].mxu0
    %v1937 = vpop.f32.mrb[0].mxu0
    %v1938 = vadd.f32 %v1842, %v1937
    %v1939 = vpop.f32.mrb[0].mxu0
    %1940 = vmatprep.mubr.bf16.mxu0 0
    %1941 = vmatmul.mubr.bf16.gmra.mrb[0].mxu0 %v1834
    %v1942 = vpop.f32.mrb[0].mxu0
    %v1943 = vadd.f32 %v1842, %v1942
    %v1944 = vpop.f32.mrb[0].mxu0
    %v1945 = vpop.f32.mrb[0].mxu0
    %v1946 = vadd.f32 %v1842, %v1945
    %v1947 = vpop.f32.mrb[0].mxu0
    %1948 = vmatprep.mubr.bf16.mxu0 0
    %1949 = vmatmul.mubr.bf16.gmra.mrb[0].mxu0 %v1835
    %v1950 = vpop.f32.mrb[0].mxu0
    %v1951 = vadd.f32 %v1842, %v1950
    %v1952 = vpop.f32.mrb[0].mxu0
    %v1953 = vpop.f32.mrb[0].mxu0
    %v1954 = vadd.f32 %v1842, %v1953
    %v1955 = vpop.f32.mrb[0].mxu0
    %1956 = vmatprep.mubr.bf16.mxu0 0
    %1957 = vmatmul.mubr.bf16.gmra.mrb[0].mxu0 %v1836
    %v1958 = vpop.f32.mrb[0].mxu0
    %v1959 = vadd.f32 %v1842, %v1958
    %v1960 = vpop.f32.mrb[0].mxu0
    %v1961 = vpop.f32.mrb[0].mxu0
    %v1962 = vadd.f32 %v1842, %v1961
    %v1963 = vpop.f32.mrb[0].mxu0
    %1964 = vmatprep.mubr.bf16.mxu0 0
    %1965 = vmatmul.mubr.bf16.gmra.mrb[0].mxu0 %v1837
    %v1966 = vpop.f32.mrb[0].mxu0
    %v1967 = vadd.f32 %v1842, %v1966
    %v1968 = vpop.f32.mrb[0].mxu0
    %v1969 = vpop.f32.mrb[0].mxu0
    %v1970 = vadd.f32 %v1842, %v1969
    %v1971 = vpop.f32.mrb[0].mxu0
    %1972 = vdwg.mxu0
    %vm1973 = vcmp.ge.f32.partialorder %v1927, 0.0
    %vm1974 = vcmp.ge.f32.partialorder %v1930, 0.0
    %vm1975 = vcmp.ge.f32.partialorder %v1935, 0.0
    %vm1976 = vcmp.ge.f32.partialorder %v1938, 0.0
    %vm1977 = vcmp.ge.f32.partialorder %v1943, 0.0
    %vm1978 = vcmp.ge.f32.partialorder %v1946, 0.0
    %vm1979 = vcmp.ge.f32.partialorder %v1951, 0.0
    %vm1980 = vcmp.ge.f32.partialorder %v1954, 0.0
    %vm1981 = vcmp.ge.f32.partialorder %v1959, 0.0
    %vm1982 = vcmp.ge.f32.partialorder %v1962, 0.0
    %vm1983 = vcmp.ge.f32.partialorder %v1967, 0.0
    %vm1984 = vcmp.ge.f32.partialorder %v1970, 0.0
    %v1985 = vmul.f32 %v1927, 0.2
    %v1986 = vmul.f32 %v1930, 0.2
    %v1987 = vmul.f32 %v1935, 0.2
    %v1988 = vmul.f32 %v1938, 0.2
    %v1989 = vmul.f32 %v1943, 0.2
    %v1990 = vmul.f32 %v1946, 0.2
    %v1991 = vmul.f32 %v1951, 0.2
    %v1992 = vmul.f32 %v1954, 0.2
    %v1993 = vmul.f32 %v1959, 0.2
    %v1994 = vmul.f32 %v1962, 0.2
    %v1995 = vmul.f32 %v1967, 0.2
    %v1996 = vmul.f32 %v1970, 0.2
    %v1997 = vsel %vm1973, %v1927, %v1985
    %v1998 = vsel %vm1974, %v1930, %v1986
    %v1999 = vsel %vm1975, %v1935, %v1987
    %v2000 = vsel %vm1976, %v1938, %v1988
    %v2001 = vsel %vm1977, %v1943, %v1989
    %v2002 = vsel %vm1978, %v1946, %v1990
    %v2003 = vsel %vm1979, %v1951, %v1991
    %v2004 = vsel %vm1980, %v1954, %v1992
    %v2005 = vsel %vm1981, %v1959, %v1993
    %v2006 = vsel %vm1982, %v1962, %v1994
    %v2007 = vsel %vm1983, %v1967, %v1995
    %v2008 = vsel %vm1984, %v1970, %v1996
    %v2010 = vlaneseq
    %v2011 = vshrl.u32 %v2010, 7
    %v2012 = vsub.s32 0, %v2011
    %v2013 = vrot.slane %v225, %v2012
    %v2015 = vmul.f32 %v1997, %v2013
    %v2016 = vmul.f32 %v1998, %v2013
    %v2017 = vmul.f32 %v1999, %v2013
    %v2018 = vmul.f32 %v2000, %v2013
    %v2019 = vmul.f32 %v2001, %v2013
    %v2020 = vmul.f32 %v2002, %v2013
    %v2021 = vmul.f32 %v2003, %v2013
    %v2022 = vmul.f32 %v2004, %v2013
    %v2023 = vmul.f32 %v2005, %v2013
    %v2024 = vmul.f32 %v2006, %v2013
    %v2025 = vmul.f32 %v2007, %v2013
    %v2026 = vmul.f32 %v2008, %v2013
    %2027 = vadd.xlane.f32.xlu0 %v2015
    %v2028 = vpop.xlane.xlu0 %2027
    %2029 = vadd.xlane.f32.xlu0 %v2016
    %v2030 = vpop.xlane.xlu0 %2029
    %2031 = vadd.xlane.f32.xlu0 %v2017
    %v2032 = vpop.xlane.xlu0 %2031
    %2033 = vadd.xlane.f32.xlu0 %v2018
    %v2034 = vpop.xlane.xlu0 %2033
    %2035 = vadd.xlane.f32.xlu0 %v2019
    %v2036 = vpop.xlane.xlu0 %2035
    %2037 = vadd.xlane.f32.xlu0 %v2020
    %v2038 = vpop.xlane.xlu0 %2037
    %2039 = vadd.xlane.f32.xlu0 %v2021
    %v2040 = vpop.xlane.xlu0 %2039
    %2041 = vadd.xlane.f32.xlu0 %v2022
    %v2042 = vpop.xlane.xlu0 %2041
    %2043 = vadd.xlane.f32.xlu0 %v2023
    %v2044 = vpop.xlane.xlu0 %2043
    %2045 = vadd.xlane.f32.xlu0 %v2024
    %v2046 = vpop.xlane.xlu0 %2045
    %2047 = vadd.xlane.f32.xlu0 %v2025
    %v2048 = vpop.xlane.xlu0 %2047
    %2049 = vadd.xlane.f32.xlu0 %v2026
    %v2050 = vpop.xlane.xlu0 %2049
    %v2052 = vlaneseq
    %v2053 = vshrl.u32 %v2052, 7
    %v2054 = vsub.s32 0, %v2053
    %v2055 = vrot.slane %v226, %v2054
    %v2057 = vadd.f32 %v2028, %v2055
    %v2058 = vadd.f32 %v2030, %v2055
    %v2059 = vadd.f32 %v2032, %v2055
    %v2060 = vadd.f32 %v2034, %v2055
    %v2061 = vadd.f32 %v2036, %v2055
    %v2062 = vadd.f32 %v2038, %v2055
    %v2063 = vadd.f32 %v2040, %v2055
    %v2064 = vadd.f32 %v2042, %v2055
    %v2065 = vadd.f32 %v2044, %v2055
    %v2066 = vadd.f32 %v2046, %v2055
    %v2067 = vadd.f32 %v2048, %v2055
    %v2068 = vadd.f32 %v2050, %v2055
    %2069 = vst [vmem:[#allocation13] sm:$0xff] %v2057
    %2070 = vst [vmem:[#allocation13 + $0x8] sm:$0xff] %v2058
    %2071 = vst [vmem:[#allocation13 + $0x10] sm:$0xff] %v2059
    %2072 = vst [vmem:[#allocation13 + $0x18] sm:$0xff] %v2060
    %2073 = vst [vmem:[#allocation13 + $0x20] sm:$0xff] %v2061
    %2074 = vst [vmem:[#allocation13 + $0x28] sm:$0xff] %v2062
    %2075 = vst [vmem:[#allocation13 + $0x30] sm:$0xff] %v2063
    %2076 = vst [vmem:[#allocation13 + $0x38] sm:$0xff] %v2064
    %2077 = vst [vmem:[#allocation13 + $0x40] sm:$0xff] %v2065
    %2078 = vst [vmem:[#allocation13 + $0x48] sm:$0xff] %v2066
    %2079 = vst [vmem:[#allocation13 + $0x50] sm:$0xff] %v2067
    %2080 = vst [vmem:[#allocation13 + $0x58] sm:$0xff] %v2068
    // Predicated region
    $region62: #{tpu_custom_call.1} parent=1 // pred_check
      _
    $region63: #{tpu_custom_call.1} parent=1 // pred_check_branch
      %2082 = sbr.rel (0) target = $region65
    $region64: #{tpu_custom_call.1} parent=1 // pred_region
      %s2084 = ssub.s32 1536, 1536
      %2085 = vsyncadd [#allocation4], %s2084
      %s2086 = sshll.u32 [#allocation13], 4
      %s2087 = int_to_ptr.vmem [resolvable:$true] %s2086
      %2092 = dma.vmem_to_hbm [thread:$0]  %s2087, 1536, %s9, [#allocation4], 128, 128, 8
    $region65: #{tpu_custom_call.1} parent=1 // pred_fallthru
      _
    // Predicated region
    $region66: #{tpu_custom_call.1} parent=1 // pred_check
      _
    $region67: #{tpu_custom_call.1} parent=1 // pred_check_branch
      %2094 = sbr.rel (0) target = $region69
    $region68: #{tpu_custom_call.1} parent=1 // pred_region
      %2095 = dma.done [#allocation4], 1536
    $region69: #{tpu_custom_call.1} parent=1 // pred_fallthru
      _
    %2096 = vsyncpa [#allocation3], 1
    %2097 = vsyncpa [#allocation6], 1
    %2098 = vsyncpa [#allocation9], 1
    %2099 = vsyncpa [#allocation12], 1
    %2100 = vsyncpa [#allocation4], 1

</llo_original>
